<compile_context>
chip_gen: v5e
topology: v5e:2x2
jax: 0.10.0
libtpu: 0.0.40
codegen_flags: <defaults>
</compile_context>

<pallas_src>
import functools

import jax
import jax.numpy as jnp
from jax.experimental import pallas as pl
from jax.experimental.pallas import tpu as pltpu


def _round_up(x, m):
    return (x + m - 1) // m * m


def _instance_norm(y, valid, inv_hw, eps):
    """Per-row InstanceNorm over the valid lanes of a (rows, lanes) f32 slab."""
    ym = jnp.where(valid, y, 0.0)
    mean = jnp.sum(ym, axis=-1, keepdims=True) * inv_hw
    cen = jnp.where(valid, y - mean, 0.0)                 # centered two-pass var
    var = jnp.sum(cen * cen, axis=-1, keepdims=True) * inv_hw   # biased, like PyTorch
    return (y - mean) * jax.lax.rsqrt(var + eps)


def _res_block_kernel(xp_ref, w1_ref, b1_ref, w2_ref, b2_ref, o_ref,
                      *, C, H, W, Lpad, eps):
    """One sample: out = x + IN(conv2(ReLU(IN(conv1(x))))).

    Layout: padded activations are flattened row-major over (H+2, W+2) into a
    lane dim of length Lpad >= (H+2)*(W+2)+2.  The 3x3 tap (dy, dx) is the
    length H*(W+2) lane-slice starting at dy*(W+2)+dx, so the conv is 9
    accumulated MXU matmuls -- no im2col tensor is materialized anywhere.
    Columns W, W+1 of each slab row are junk and are masked out of the stats.
    """
    Wp = W + 2
    Lv = H * Wp
    inv_hw = 1.0 / (H * W)

    # Lane-validity mask of the slab layout.
    col = jax.lax.broadcasted_iota(jnp.int32, (1, Lv), 1) % Wp
    valid = col < W

    def conv3x3_in(src, w, b_ref, relu):
        # src: (C, Lpad) zero-padded activations in the matmul dtype (bf16).
        acc = jnp.zeros((C, Lv), jnp.float32)
        for dy in range(3):
            for dx in range(3):
                off = dy * Wp + dx
                acc = acc + jnp.dot(w[dy * 3 + dx], src[:, off:off + Lv],
                                    preferred_element_type=jnp.float32)
        y = acc + b_ref[...]                              # (C, 1) f32 bias
        y = _instance_norm(y, valid, inv_hw, eps)
        return jnp.maximum(y, 0.0) if relu else y         # (C, Lv) f32

    xp = xp_ref[0]                                        # (C, Lpad) bf16
    h1 = conv3x3_in(xp, w1_ref[...], b1_ref, relu=True)

    # Re-pad the intermediate entirely on-chip (no HBM round-trip): zero the
    # junk columns and shift the slab by Wp+1 lanes so element (h, w) lands at
    # padded position (h+1, w+1); the zero side-pads supply the halo.
    cdt = xp.dtype
    h1z = jnp.where(valid, h1, 0.0).astype(cdt)
    hpad = jnp.concatenate(
        [jnp.zeros((C, Wp + 1), cdt), h1z,
         jnp.zeros((C, Lpad - (Wp + 1) - Lv), cdt)], axis=1)    # (C, Lpad)

    h2 = conv3x3_in(hpad, w2_ref[...], b2_ref, relu=False)

    # Residual = the input itself, read in slab layout from the same shift.
    res = xp[:, Wp + 1:Wp + 1 + Lv].astype(jnp.float32)
    o_ref[0] = (h2 + res).astype(o_ref.dtype)


def prepare_resblock_params(params, compute_dtype=jnp.bfloat16):
    """One-time conversion of PyTorch-layout params to the kernel layout.

    params: list of (w1, b1, w2, b2); w: (Cout, Cin, 3, 3), b: (Cout,).
    Returns (w_taps: (9, Cout, Cin) in compute_dtype, b: (Cout, 1) f32) pairs.
    """
    def prep_w(w):
        o, i = w.shape[0], w.shape[1]
        return jnp.transpose(w, (2, 3, 0, 1)).reshape(9, o, i).astype(compute_dtype)

    def prep_b(b):
        return b.reshape(-1, 1).astype(jnp.float32)

    return [(prep_w(w1), prep_b(b1), prep_w(w2), prep_b(b2))
            for (w1, b1, w2, b2) in params]


def res_block_pallas(x, w1, b1, w2, b2, *, eps=1e-5, compute_dtype=jnp.bfloat16):
    """One fused ResBlock: x + IN(conv2(ReLU(IN(conv1(x)))))."""
    B, C, H, W = x.shape
    assert w1.shape == (9, C, C) and w2.shape == (9, C, C)
    Hp, Wp = H + 2, W + 2
    Lp, Lv = Hp * Wp, H * Wp
    Lpad = _round_up(Lp + 2, 128)     # room for the largest tap shift, lane-aligned

    # The only extra HBM traffic: one zero-padded, flattened bf16 copy of x.
    xp = jnp.pad(x, ((0, 0), (0, 0), (1, 1), (1, 1))).reshape(B, C, Lp)
    xp = jnp.pad(xp, ((0, 0), (0, 0), (0, Lpad - Lp))).astype(compute_dtype)

    kernel = functools.partial(_res_block_kernel, C=C, H=H, W=W, Lpad=Lpad, eps=eps)

    cd = jnp.dtype(compute_dtype).itemsize
    od = x.dtype.itemsize
    vmem_need = (2 * C * Lpad * cd          # input block (double-buffered)
                 + 2 * C * Lv * od          # output block (double-buffered)
                 + 2 * 9 * C * C * cd       # resident weights
                 + 2 * C * 4                # resident biases
                 + 8 * C * Lv * 4)          # f32 in-kernel temporaries headroom
    vmem_limit = int(min(max(2 * vmem_need, 16 * 2 ** 20), 48 * 2 ** 20))

    cost = pl.CostEstimate(
        flops=int(2 * B * 2 * C * (9 * C) * Lv),
        transcendentals=int(2 * B * C),
        bytes_accessed=int(B * C * Lpad * cd + B * C * Lv * od
                           + 2 * 9 * C * C * cd + 2 * C * 4),
    )

    out = pl.pallas_call(
        kernel,
        out_shape=jax.ShapeDtypeStruct((B, C, Lv), x.dtype),
        grid_spec=pltpu.PrefetchScalarGridSpec(
            num_scalar_prefetch=0,
            grid=(B,),                                        # one sample / step
            in_specs=[
                pl.BlockSpec((1, C, Lpad), lambda b: (b, 0, 0)),
                pl.BlockSpec((9, C, C), lambda b: (0, 0, 0)),     # resident
                pl.BlockSpec((C, 1), lambda b: (0, 0)),           # resident
                pl.BlockSpec((9, C, C), lambda b: (0, 0, 0)),     # resident
                pl.BlockSpec((C, 1), lambda b: (0, 0)),           # resident
            ],
            out_specs=pl.BlockSpec((1, C, Lv), lambda b: (b, 0, 0)),
        ),
        compiler_params=pltpu.CompilerParams(
            dimension_semantics=("parallel",),
            vmem_limit_bytes=vmem_limit,
        ),
        cost_estimate=cost,
    )(xp, w1, b1, w2, b2)

    # Drop the two junk columns per row of the slab layout.
    return out.reshape(B, C, H, Wp)[:, :, :, :W]


def res_blocks_forward(x, prepared_params, *, eps=1e-5, compute_dtype=jnp.bfloat16):
    """ResBlocks forward. prepared_params: output of prepare_resblock_params."""
    for (w1, b1, w2, b2) in prepared_params:
        x = res_block_pallas(x, w1, b1, w2, b2, eps=eps, compute_dtype=compute_dtype)
    return x


# ----------------------------- pure-JAX references -----------------------------

def _conv_block_reference(x, w, b, *, relu, eps, compute_dtype=None):
    if compute_dtype is not None:
        xc, wc, prec = x.astype(compute_dtype), w.astype(compute_dtype), None
    else:
        xc, wc, prec = x, w, jax.lax.Precision.HIGHEST
    y = jax.lax.conv_general_dilated(
        xc, wc, window_strides=(1, 1), padding=((1, 1), (1, 1)),
        dimension_numbers=("NCHW", "OIHW", "NCHW"),
        preferred_element_type=jnp.float32, precision=prec)
    y = y + b.reshape(1, -1, 1, 1).astype(jnp.float32)
    mean = y.mean(axis=(2, 3), keepdims=True)
    var = jnp.mean((y - mean) ** 2, axis=(2, 3), keepdims=True)   # biased
    y = (y - mean) * jax.lax.rsqrt(var + eps)
    if relu:
        y = jnp.maximum(y, 0.0)
    return y


def _res_blocks_reference(x, params, *, eps=1e-5, compute_dtype=None):
    for (w1, b1, w2, b2) in params:
        if compute_dtype is not None:
            r = x.astype(compute_dtype).astype(jnp.float32)
        else:
            r = x
        h = _conv_block_reference(x, w1, b1, relu=True, eps=eps,
                                  compute_dtype=compute_dtype)
        h = _conv_block_reference(h, w2, b2, relu=False, eps=eps,
                                  compute_dtype=compute_dtype)
        x = h + r
    return x


if __name__ == "__main__":
    key = jax.random.PRNGKey(0)
    num_blocks, dim = 2, 8
    B, H, W = 2, 16, 16

    keys = jax.random.split(key, 1 + 4 * num_blocks)
    x = jax.random.normal(keys[0], (B, dim, H, W), dtype=jnp.float32)

    params = []
    k = 1
    for _ in range(num_blocks):
        w1 = 0.2 * jax.random.normal(keys[k], (dim, dim, 3, 3), jnp.float32); k += 1
        b1 = 0.1 * jax.random.normal(keys[k], (dim,), jnp.float32); k += 1
        w2 = 0.2 * jax.random.normal(keys[k], (dim, dim, 3, 3), jnp.float32); k += 1
        b2 = 0.1 * jax.random.normal(keys[k], (dim,), jnp.float32); k += 1
        params.append((w1, b1, w2, b2))

    compute_dtype = jnp.bfloat16
    prepared = prepare_resblock_params(params, compute_dtype=compute_dtype)

    fwd = jax.jit(functools.partial(res_blocks_forward, eps=1e-5,
                                    compute_dtype=compute_dtype))
    out = jax.block_until_ready(fwd(x, prepared))
    assert out.shape == x.shape

    # Reference with the same bf16 operand casts / f32 accumulation as the kernel.
    ref_m = _res_blocks_reference(x, params, eps=1e-5, compute_dtype=compute_dtype)
    err_m = float(jnp.max(jnp.abs(out - ref_m)))
    assert jnp.allclose(out, ref_m, atol=2e-2, rtol=2e-2), f"matched-ref max err {err_m}"

    # Full-precision PyTorch-spec reference; loose tolerance absorbs bf16 operands.
    ref_f = _res_blocks_reference(x, params, eps=1e-5, compute_dtype=None)
    err_f = float(jnp.max(jnp.abs(out - ref_f)))
    assert jnp.allclose(out, ref_f, atol=1.5e-1, rtol=1.5e-1), f"f32-ref max err {err_f}"

    print("KERNEL_OK")
</pallas_src>

<mosaic_0001>
module attributes {stable_mosaic.version = 11 : i64} {
  func.func @_res_block_kernel(%arg0: i32, %arg1: memref<1x8x384xbf16, #tpu.memory_space<vmem>>, %arg2: memref<9x8x8xbf16, #tpu.memory_space<vmem>>, %arg3: memref<8x1xf32, #tpu.memory_space<vmem>>, %arg4: memref<9x8x8xbf16, #tpu.memory_space<vmem>>, %arg5: memref<8x1xf32, #tpu.memory_space<vmem>>, %arg6: memref<1x8x288xf32, #tpu.memory_space<vmem>>) attributes {dimension_semantics = [#tpu.dimension_semantics<parallel>], iteration_bounds = array<i64: 2>, scalar_prefetch = 0 : i64, scratch_operands = 0 : i64, tpu.core_type = #tpu.core_type<tc>, window_params = [{transform_indices = @transform_0, window_bounds = array<i64: 1, 8, 384>}, {pipeline_mode = #tpu.pipeline_mode<synchronous>, transform_indices = @transform_1, window_bounds = array<i64: 9, 8, 8>}, {pipeline_mode = #tpu.pipeline_mode<synchronous>, transform_indices = @transform_2, window_bounds = array<i64: 8, 1>}, {pipeline_mode = #tpu.pipeline_mode<synchronous>, transform_indices = @transform_3, window_bounds = array<i64: 9, 8, 8>}, {pipeline_mode = #tpu.pipeline_mode<synchronous>, transform_indices = @transform_4, window_bounds = array<i64: 8, 1>}, {transform_indices = @transform_5, window_bounds = array<i64: 1, 8, 288>}]} {
    %0 = tpu.iota {dimensions = array<i32: 1>} : vector<1x288xi32>
    %c18_i32 = arith.constant 18 : i32
    %c0_i32 = arith.constant 0 : i32
    %1 = arith.cmpi eq, %c18_i32, %c0_i32 : i32
    %c1_i32 = arith.constant 1 : i32
    %2 = arith.select %1, %c1_i32, %c18_i32 : i32
    %3 = vector.broadcast %2 : i32 to vector<1x288xi32>
    %4 = arith.remsi %0, %3 : vector<1x288xi32>
    %c0_i32_0 = arith.constant 0 : i32
    %5 = vector.broadcast %c0_i32_0 : i32 to vector<1x288xi32>
    %6 = arith.cmpi ne, %4, %5 : vector<1x288xi32>
    %c0_i32_1 = arith.constant 0 : i32
    %7 = vector.broadcast %c0_i32_1 : i32 to vector<1x288xi32>
    %8 = arith.cmpi slt, %4, %7 : vector<1x288xi32>
    %c0_i32_2 = arith.constant 0 : i32
    %9 = arith.cmpi slt, %2, %c0_i32_2 : i32
    %10 = vector.broadcast %9 : i1 to vector<1x288xi1>
    %11 = vector.broadcast %10 : vector<1x288xi1> to vector<1x288xi1>
    %12 = arith.xori %8, %11 : vector<1x288xi1>
    %13 = arith.andi %12, %6 : vector<1x288xi1>
    %14 = vector.broadcast %2 : i32 to vector<1x288xi32>
    %15 = arith.addi %4, %14 : vector<1x288xi32>
    %16 = arith.select %13, %15, %4 : vector<1x288xi1>, vector<1x288xi32>
    %c16_i32 = arith.constant 16 : i32
    %17 = vector.broadcast %c16_i32 : i32 to vector<1x288xi32>
    %18 = arith.cmpi slt, %16, %17 : vector<1x288xi32>
    %c0 = arith.constant 0 : index
    %c0_3 = arith.constant 0 : index
    %c0_4 = arith.constant 0 : index
    %19 = vector.load %arg1[%c0, %c0_3, %c0_4] : memref<1x8x384xbf16, #tpu.memory_space<vmem>>, vector<1x8x384xbf16>
    %20 = vector.shape_cast %19 : vector<1x8x384xbf16> to vector<8x384xbf16>
    %c0_5 = arith.constant 0 : index
    %c0_6 = arith.constant 0 : index
    %c0_7 = arith.constant 0 : index
    %21 = vector.load %arg2[%c0_5, %c0_6, %c0_7] : memref<9x8x8xbf16, #tpu.memory_space<vmem>>, vector<9x8x8xbf16>
    %cst = arith.constant 0.000000e+00 : f32
    %22 = vector.broadcast %cst : f32 to vector<8x288xf32>
    %23 = vector.extract_strided_slice %21 {offsets = [0, 0, 0], sizes = [1, 8, 8], strides = [1, 1, 1]} : vector<9x8x8xbf16> to vector<1x8x8xbf16>
    %24 = vector.shape_cast %23 : vector<1x8x8xbf16> to vector<8x8xbf16>
    %25 = vector.extract_strided_slice %20 {offsets = [0, 0], sizes = [8, 288], strides = [1, 1]} : vector<8x384xbf16> to vector<8x288xbf16>
    %cst_8 = arith.constant dense<0.000000e+00> : vector<8x288xf32>
    %26 = tpu.matmul %24, %25, %cst_8 {dimension_numbers = #tpu.dot_dimension_numbers<[1], [0], [0], [1], [0, 0, 1, 1], [], []>} : vector<8x8xbf16>, vector<8x288xbf16>, vector<8x288xf32> -> vector<8x288xf32>
    %27 = arith.addf %22, %26 : vector<8x288xf32>
    %28 = vector.extract_strided_slice %21 {offsets = [1, 0, 0], sizes = [1, 8, 8], strides = [1, 1, 1]} : vector<9x8x8xbf16> to vector<1x8x8xbf16>
    %29 = vector.shape_cast %28 : vector<1x8x8xbf16> to vector<8x8xbf16>
    %30 = vector.extract_strided_slice %20 {offsets = [0, 1], sizes = [8, 288], strides = [1, 1]} : vector<8x384xbf16> to vector<8x288xbf16>
    %cst_9 = arith.constant dense<0.000000e+00> : vector<8x288xf32>
    %31 = tpu.matmul %29, %30, %cst_9 {dimension_numbers = #tpu.dot_dimension_numbers<[1], [0], [0], [1], [0, 0, 1, 1], [], []>} : vector<8x8xbf16>, vector<8x288xbf16>, vector<8x288xf32> -> vector<8x288xf32>
    %32 = arith.addf %27, %31 : vector<8x288xf32>
    %33 = vector.extract_strided_slice %21 {offsets = [2, 0, 0], sizes = [1, 8, 8], strides = [1, 1, 1]} : vector<9x8x8xbf16> to vector<1x8x8xbf16>
    %34 = vector.shape_cast %33 : vector<1x8x8xbf16> to vector<8x8xbf16>
    %35 = vector.extract_strided_slice %20 {offsets = [0, 2], sizes = [8, 288], strides = [1, 1]} : vector<8x384xbf16> to vector<8x288xbf16>
    %cst_10 = arith.constant dense<0.000000e+00> : vector<8x288xf32>
    %36 = tpu.matmul %34, %35, %cst_10 {dimension_numbers = #tpu.dot_dimension_numbers<[1], [0], [0], [1], [0, 0, 1, 1], [], []>} : vector<8x8xbf16>, vector<8x288xbf16>, vector<8x288xf32> -> vector<8x288xf32>
    %37 = arith.addf %32, %36 : vector<8x288xf32>
    %38 = vector.extract_strided_slice %21 {offsets = [3, 0, 0], sizes = [1, 8, 8], strides = [1, 1, 1]} : vector<9x8x8xbf16> to vector<1x8x8xbf16>
    %39 = vector.shape_cast %38 : vector<1x8x8xbf16> to vector<8x8xbf16>
    %40 = vector.extract_strided_slice %20 {offsets = [0, 18], sizes = [8, 288], strides = [1, 1]} : vector<8x384xbf16> to vector<8x288xbf16>
    %cst_11 = arith.constant dense<0.000000e+00> : vector<8x288xf32>
    %41 = tpu.matmul %39, %40, %cst_11 {dimension_numbers = #tpu.dot_dimension_numbers<[1], [0], [0], [1], [0, 0, 1, 1], [], []>} : vector<8x8xbf16>, vector<8x288xbf16>, vector<8x288xf32> -> vector<8x288xf32>
    %42 = arith.addf %37, %41 : vector<8x288xf32>
    %43 = vector.extract_strided_slice %21 {offsets = [4, 0, 0], sizes = [1, 8, 8], strides = [1, 1, 1]} : vector<9x8x8xbf16> to vector<1x8x8xbf16>
    %44 = vector.shape_cast %43 : vector<1x8x8xbf16> to vector<8x8xbf16>
    %45 = vector.extract_strided_slice %20 {offsets = [0, 19], sizes = [8, 288], strides = [1, 1]} : vector<8x384xbf16> to vector<8x288xbf16>
    %cst_12 = arith.constant dense<0.000000e+00> : vector<8x288xf32>
    %46 = tpu.matmul %44, %45, %cst_12 {dimension_numbers = #tpu.dot_dimension_numbers<[1], [0], [0], [1], [0, 0, 1, 1], [], []>} : vector<8x8xbf16>, vector<8x288xbf16>, vector<8x288xf32> -> vector<8x288xf32>
    %47 = arith.addf %42, %46 : vector<8x288xf32>
    %48 = vector.extract_strided_slice %21 {offsets = [5, 0, 0], sizes = [1, 8, 8], strides = [1, 1, 1]} : vector<9x8x8xbf16> to vector<1x8x8xbf16>
    %49 = vector.shape_cast %48 : vector<1x8x8xbf16> to vector<8x8xbf16>
    %50 = vector.extract_strided_slice %20 {offsets = [0, 20], sizes = [8, 288], strides = [1, 1]} : vector<8x384xbf16> to vector<8x288xbf16>
    %cst_13 = arith.constant dense<0.000000e+00> : vector<8x288xf32>
    %51 = tpu.matmul %49, %50, %cst_13 {dimension_numbers = #tpu.dot_dimension_numbers<[1], [0], [0], [1], [0, 0, 1, 1], [], []>} : vector<8x8xbf16>, vector<8x288xbf16>, vector<8x288xf32> -> vector<8x288xf32>
    %52 = arith.addf %47, %51 : vector<8x288xf32>
    %53 = vector.extract_strided_slice %21 {offsets = [6, 0, 0], sizes = [1, 8, 8], strides = [1, 1, 1]} : vector<9x8x8xbf16> to vector<1x8x8xbf16>
    %54 = vector.shape_cast %53 : vector<1x8x8xbf16> to vector<8x8xbf16>
    %55 = vector.extract_strided_slice %20 {offsets = [0, 36], sizes = [8, 288], strides = [1, 1]} : vector<8x384xbf16> to vector<8x288xbf16>
    %cst_14 = arith.constant dense<0.000000e+00> : vector<8x288xf32>
    %56 = tpu.matmul %54, %55, %cst_14 {dimension_numbers = #tpu.dot_dimension_numbers<[1], [0], [0], [1], [0, 0, 1, 1], [], []>} : vector<8x8xbf16>, vector<8x288xbf16>, vector<8x288xf32> -> vector<8x288xf32>
    %57 = arith.addf %52, %56 : vector<8x288xf32>
    %58 = vector.extract_strided_slice %21 {offsets = [7, 0, 0], sizes = [1, 8, 8], strides = [1, 1, 1]} : vector<9x8x8xbf16> to vector<1x8x8xbf16>
    %59 = vector.shape_cast %58 : vector<1x8x8xbf16> to vector<8x8xbf16>
    %60 = vector.extract_strided_slice %20 {offsets = [0, 37], sizes = [8, 288], strides = [1, 1]} : vector<8x384xbf16> to vector<8x288xbf16>
    %cst_15 = arith.constant dense<0.000000e+00> : vector<8x288xf32>
    %61 = tpu.matmul %59, %60, %cst_15 {dimension_numbers = #tpu.dot_dimension_numbers<[1], [0], [0], [1], [0, 0, 1, 1], [], []>} : vector<8x8xbf16>, vector<8x288xbf16>, vector<8x288xf32> -> vector<8x288xf32>
    %62 = arith.addf %57, %61 : vector<8x288xf32>
    %63 = vector.extract_strided_slice %21 {offsets = [8, 0, 0], sizes = [1, 8, 8], strides = [1, 1, 1]} : vector<9x8x8xbf16> to vector<1x8x8xbf16>
    %64 = vector.shape_cast %63 : vector<1x8x8xbf16> to vector<8x8xbf16>
    %65 = vector.extract_strided_slice %20 {offsets = [0, 38], sizes = [8, 288], strides = [1, 1]} : vector<8x384xbf16> to vector<8x288xbf16>
    %cst_16 = arith.constant dense<0.000000e+00> : vector<8x288xf32>
    %66 = tpu.matmul %64, %65, %cst_16 {dimension_numbers = #tpu.dot_dimension_numbers<[1], [0], [0], [1], [0, 0, 1, 1], [], []>} : vector<8x8xbf16>, vector<8x288xbf16>, vector<8x288xf32> -> vector<8x288xf32>
    %67 = arith.addf %62, %66 : vector<8x288xf32>
    %c0_17 = arith.constant 0 : index
    %c0_18 = arith.constant 0 : index
    %68 = vector.load %arg3[%c0_17, %c0_18] : memref<8x1xf32, #tpu.memory_space<vmem>>, vector<8x1xf32>
    %69 = vector.broadcast %68 : vector<8x1xf32> to vector<8x288xf32>
    %70 = arith.addf %67, %69 : vector<8x288xf32>
    %cst_19 = arith.constant 0.000000e+00 : f32
    %71 = vector.shape_cast %18 : vector<1x288xi1> to vector<1x288xi1>
    %72 = vector.broadcast %71 : vector<1x288xi1> to vector<8x288xi1>
    %73 = vector.broadcast %cst_19 : f32 to vector<8x288xf32>
    %74 = arith.select %72, %70, %73 : vector<8x288xi1>, vector<8x288xf32>
    %cst_20 = arith.constant dense<0.000000e+00> : vector<8xf32>
    %75 = vector.multi_reduction <add>, %74, %cst_20 [1] : vector<8x288xf32> to vector<8xf32>
    %76 = vector.shape_cast %75 : vector<8xf32> to vector<8x1xf32>
    %cst_21 = arith.constant 3.906250e-03 : f32
    %77 = vector.broadcast %cst_21 : f32 to vector<8x1xf32>
    %78 = arith.mulf %76, %77 : vector<8x1xf32>
    %79 = vector.broadcast %78 : vector<8x1xf32> to vector<8x288xf32>
    %80 = arith.subf %70, %79 : vector<8x288xf32>
    %cst_22 = arith.constant 0.000000e+00 : f32
    %81 = vector.shape_cast %18 : vector<1x288xi1> to vector<1x288xi1>
    %82 = vector.broadcast %81 : vector<1x288xi1> to vector<8x288xi1>
    %83 = vector.broadcast %cst_22 : f32 to vector<8x288xf32>
    %84 = arith.select %82, %80, %83 : vector<8x288xi1>, vector<8x288xf32>
    %85 = arith.mulf %84, %84 : vector<8x288xf32>
    %cst_23 = arith.constant dense<0.000000e+00> : vector<8xf32>
    %86 = vector.multi_reduction <add>, %85, %cst_23 [1] : vector<8x288xf32> to vector<8xf32>
    %87 = vector.shape_cast %86 : vector<8xf32> to vector<8x1xf32>
    %cst_24 = arith.constant 3.906250e-03 : f32
    %88 = vector.broadcast %cst_24 : f32 to vector<8x1xf32>
    %89 = arith.mulf %87, %88 : vector<8x1xf32>
    %90 = vector.broadcast %78 : vector<8x1xf32> to vector<8x288xf32>
    %91 = arith.subf %70, %90 : vector<8x288xf32>
    %cst_25 = arith.constant 9.99999974E-6 : f32
    %92 = vector.broadcast %cst_25 : f32 to vector<8x1xf32>
    %93 = arith.addf %89, %92 : vector<8x1xf32>
    %94 = math.rsqrt %93 : vector<8x1xf32>
    %95 = vector.broadcast %94 : vector<8x1xf32> to vector<8x288xf32>
    %96 = arith.mulf %91, %95 : vector<8x288xf32>
    %cst_26 = arith.constant 0.000000e+00 : f32
    %97 = vector.broadcast %cst_26 : f32 to vector<8x288xf32>
    %98 = arith.maximumf %96, %97 : vector<8x288xf32>
    %cst_27 = arith.constant 0.000000e+00 : f32
    %99 = vector.shape_cast %18 : vector<1x288xi1> to vector<1x288xi1>
    %100 = vector.broadcast %99 : vector<1x288xi1> to vector<8x288xi1>
    %101 = vector.broadcast %cst_27 : f32 to vector<8x288xf32>
    %102 = arith.select %100, %98, %101 : vector<8x288xi1>, vector<8x288xf32>
    %103 = arith.truncf %102 : vector<8x288xf32> to vector<8x288xbf16>
    %cst_28 = arith.constant 0.000000e+00 : bf16
    %104 = vector.broadcast %cst_28 : bf16 to vector<8x19xbf16>
    %cst_29 = arith.constant 0.000000e+00 : bf16
    %105 = vector.broadcast %cst_29 : bf16 to vector<8x77xbf16>
    %106 = tpu.concatenate %104, %103, %105 in 1 : vector<8x19xbf16>, vector<8x288xbf16>, vector<8x77xbf16> -> vector<8x384xbf16>
    %c0_30 = arith.constant 0 : index
    %c0_31 = arith.constant 0 : index
    %c0_32 = arith.constant 0 : index
    %107 = vector.load %arg4[%c0_30, %c0_31, %c0_32] : memref<9x8x8xbf16, #tpu.memory_space<vmem>>, vector<9x8x8xbf16>
    %cst_33 = arith.constant 0.000000e+00 : f32
    %108 = vector.broadcast %cst_33 : f32 to vector<8x288xf32>
    %109 = vector.extract_strided_slice %107 {offsets = [0, 0, 0], sizes = [1, 8, 8], strides = [1, 1, 1]} : vector<9x8x8xbf16> to vector<1x8x8xbf16>
    %110 = vector.shape_cast %109 : vector<1x8x8xbf16> to vector<8x8xbf16>
    %111 = vector.extract_strided_slice %106 {offsets = [0, 0], sizes = [8, 288], strides = [1, 1]} : vector<8x384xbf16> to vector<8x288xbf16>
    %cst_34 = arith.constant dense<0.000000e+00> : vector<8x288xf32>
    %112 = tpu.matmul %110, %111, %cst_34 {dimension_numbers = #tpu.dot_dimension_numbers<[1], [0], [0], [1], [0, 0, 1, 1], [], []>} : vector<8x8xbf16>, vector<8x288xbf16>, vector<8x288xf32> -> vector<8x288xf32>
    %113 = arith.addf %108, %112 : vector<8x288xf32>
    %114 = vector.extract_strided_slice %107 {offsets = [1, 0, 0], sizes = [1, 8, 8], strides = [1, 1, 1]} : vector<9x8x8xbf16> to vector<1x8x8xbf16>
    %115 = vector.shape_cast %114 : vector<1x8x8xbf16> to vector<8x8xbf16>
    %116 = vector.extract_strided_slice %106 {offsets = [0, 1], sizes = [8, 288], strides = [1, 1]} : vector<8x384xbf16> to vector<8x288xbf16>
    %cst_35 = arith.constant dense<0.000000e+00> : vector<8x288xf32>
    %117 = tpu.matmul %115, %116, %cst_35 {dimension_numbers = #tpu.dot_dimension_numbers<[1], [0], [0], [1], [0, 0, 1, 1], [], []>} : vector<8x8xbf16>, vector<8x288xbf16>, vector<8x288xf32> -> vector<8x288xf32>
    %118 = arith.addf %113, %117 : vector<8x288xf32>
    %119 = vector.extract_strided_slice %107 {offsets = [2, 0, 0], sizes = [1, 8, 8], strides = [1, 1, 1]} : vector<9x8x8xbf16> to vector<1x8x8xbf16>
    %120 = vector.shape_cast %119 : vector<1x8x8xbf16> to vector<8x8xbf16>
    %121 = vector.extract_strided_slice %106 {offsets = [0, 2], sizes = [8, 288], strides = [1, 1]} : vector<8x384xbf16> to vector<8x288xbf16>
    %cst_36 = arith.constant dense<0.000000e+00> : vector<8x288xf32>
    %122 = tpu.matmul %120, %121, %cst_36 {dimension_numbers = #tpu.dot_dimension_numbers<[1], [0], [0], [1], [0, 0, 1, 1], [], []>} : vector<8x8xbf16>, vector<8x288xbf16>, vector<8x288xf32> -> vector<8x288xf32>
    %123 = arith.addf %118, %122 : vector<8x288xf32>
    %124 = vector.extract_strided_slice %107 {offsets = [3, 0, 0], sizes = [1, 8, 8], strides = [1, 1, 1]} : vector<9x8x8xbf16> to vector<1x8x8xbf16>
    %125 = vector.shape_cast %124 : vector<1x8x8xbf16> to vector<8x8xbf16>
    %126 = vector.extract_strided_slice %106 {offsets = [0, 18], sizes = [8, 288], strides = [1, 1]} : vector<8x384xbf16> to vector<8x288xbf16>
    %cst_37 = arith.constant dense<0.000000e+00> : vector<8x288xf32>
    %127 = tpu.matmul %125, %126, %cst_37 {dimension_numbers = #tpu.dot_dimension_numbers<[1], [0], [0], [1], [0, 0, 1, 1], [], []>} : vector<8x8xbf16>, vector<8x288xbf16>, vector<8x288xf32> -> vector<8x288xf32>
    %128 = arith.addf %123, %127 : vector<8x288xf32>
    %129 = vector.extract_strided_slice %107 {offsets = [4, 0, 0], sizes = [1, 8, 8], strides = [1, 1, 1]} : vector<9x8x8xbf16> to vector<1x8x8xbf16>
    %130 = vector.shape_cast %129 : vector<1x8x8xbf16> to vector<8x8xbf16>
    %131 = vector.extract_strided_slice %106 {offsets = [0, 19], sizes = [8, 288], strides = [1, 1]} : vector<8x384xbf16> to vector<8x288xbf16>
    %cst_38 = arith.constant dense<0.000000e+00> : vector<8x288xf32>
    %132 = tpu.matmul %130, %131, %cst_38 {dimension_numbers = #tpu.dot_dimension_numbers<[1], [0], [0], [1], [0, 0, 1, 1], [], []>} : vector<8x8xbf16>, vector<8x288xbf16>, vector<8x288xf32> -> vector<8x288xf32>
    %133 = arith.addf %128, %132 : vector<8x288xf32>
    %134 = vector.extract_strided_slice %107 {offsets = [5, 0, 0], sizes = [1, 8, 8], strides = [1, 1, 1]} : vector<9x8x8xbf16> to vector<1x8x8xbf16>
    %135 = vector.shape_cast %134 : vector<1x8x8xbf16> to vector<8x8xbf16>
    %136 = vector.extract_strided_slice %106 {offsets = [0, 20], sizes = [8, 288], strides = [1, 1]} : vector<8x384xbf16> to vector<8x288xbf16>
    %cst_39 = arith.constant dense<0.000000e+00> : vector<8x288xf32>
    %137 = tpu.matmul %135, %136, %cst_39 {dimension_numbers = #tpu.dot_dimension_numbers<[1], [0], [0], [1], [0, 0, 1, 1], [], []>} : vector<8x8xbf16>, vector<8x288xbf16>, vector<8x288xf32> -> vector<8x288xf32>
    %138 = arith.addf %133, %137 : vector<8x288xf32>
    %139 = vector.extract_strided_slice %107 {offsets = [6, 0, 0], sizes = [1, 8, 8], strides = [1, 1, 1]} : vector<9x8x8xbf16> to vector<1x8x8xbf16>
    %140 = vector.shape_cast %139 : vector<1x8x8xbf16> to vector<8x8xbf16>
    %141 = vector.extract_strided_slice %106 {offsets = [0, 36], sizes = [8, 288], strides = [1, 1]} : vector<8x384xbf16> to vector<8x288xbf16>
    %cst_40 = arith.constant dense<0.000000e+00> : vector<8x288xf32>
    %142 = tpu.matmul %140, %141, %cst_40 {dimension_numbers = #tpu.dot_dimension_numbers<[1], [0], [0], [1], [0, 0, 1, 1], [], []>} : vector<8x8xbf16>, vector<8x288xbf16>, vector<8x288xf32> -> vector<8x288xf32>
    %143 = arith.addf %138, %142 : vector<8x288xf32>
    %144 = vector.extract_strided_slice %107 {offsets = [7, 0, 0], sizes = [1, 8, 8], strides = [1, 1, 1]} : vector<9x8x8xbf16> to vector<1x8x8xbf16>
    %145 = vector.shape_cast %144 : vector<1x8x8xbf16> to vector<8x8xbf16>
    %146 = vector.extract_strided_slice %106 {offsets = [0, 37], sizes = [8, 288], strides = [1, 1]} : vector<8x384xbf16> to vector<8x288xbf16>
    %cst_41 = arith.constant dense<0.000000e+00> : vector<8x288xf32>
    %147 = tpu.matmul %145, %146, %cst_41 {dimension_numbers = #tpu.dot_dimension_numbers<[1], [0], [0], [1], [0, 0, 1, 1], [], []>} : vector<8x8xbf16>, vector<8x288xbf16>, vector<8x288xf32> -> vector<8x288xf32>
    %148 = arith.addf %143, %147 : vector<8x288xf32>
    %149 = vector.extract_strided_slice %107 {offsets = [8, 0, 0], sizes = [1, 8, 8], strides = [1, 1, 1]} : vector<9x8x8xbf16> to vector<1x8x8xbf16>
    %150 = vector.shape_cast %149 : vector<1x8x8xbf16> to vector<8x8xbf16>
    %151 = vector.extract_strided_slice %106 {offsets = [0, 38], sizes = [8, 288], strides = [1, 1]} : vector<8x384xbf16> to vector<8x288xbf16>
    %cst_42 = arith.constant dense<0.000000e+00> : vector<8x288xf32>
    %152 = tpu.matmul %150, %151, %cst_42 {dimension_numbers = #tpu.dot_dimension_numbers<[1], [0], [0], [1], [0, 0, 1, 1], [], []>} : vector<8x8xbf16>, vector<8x288xbf16>, vector<8x288xf32> -> vector<8x288xf32>
    %153 = arith.addf %148, %152 : vector<8x288xf32>
    %c0_43 = arith.constant 0 : index
    %c0_44 = arith.constant 0 : index
    %154 = vector.load %arg5[%c0_43, %c0_44] : memref<8x1xf32, #tpu.memory_space<vmem>>, vector<8x1xf32>
    %155 = vector.broadcast %154 : vector<8x1xf32> to vector<8x288xf32>
    %156 = arith.addf %153, %155 : vector<8x288xf32>
    %cst_45 = arith.constant 0.000000e+00 : f32
    %157 = vector.shape_cast %18 : vector<1x288xi1> to vector<1x288xi1>
    %158 = vector.broadcast %157 : vector<1x288xi1> to vector<8x288xi1>
    %159 = vector.broadcast %cst_45 : f32 to vector<8x288xf32>
    %160 = arith.select %158, %156, %159 : vector<8x288xi1>, vector<8x288xf32>
    %cst_46 = arith.constant dense<0.000000e+00> : vector<8xf32>
    %161 = vector.multi_reduction <add>, %160, %cst_46 [1] : vector<8x288xf32> to vector<8xf32>
    %162 = vector.shape_cast %161 : vector<8xf32> to vector<8x1xf32>
    %cst_47 = arith.constant 3.906250e-03 : f32
    %163 = vector.broadcast %cst_47 : f32 to vector<8x1xf32>
    %164 = arith.mulf %162, %163 : vector<8x1xf32>
    %165 = vector.broadcast %164 : vector<8x1xf32> to vector<8x288xf32>
    %166 = arith.subf %156, %165 : vector<8x288xf32>
    %cst_48 = arith.constant 0.000000e+00 : f32
    %167 = vector.shape_cast %18 : vector<1x288xi1> to vector<1x288xi1>
    %168 = vector.broadcast %167 : vector<1x288xi1> to vector<8x288xi1>
    %169 = vector.broadcast %cst_48 : f32 to vector<8x288xf32>
    %170 = arith.select %168, %166, %169 : vector<8x288xi1>, vector<8x288xf32>
    %171 = arith.mulf %170, %170 : vector<8x288xf32>
    %cst_49 = arith.constant dense<0.000000e+00> : vector<8xf32>
    %172 = vector.multi_reduction <add>, %171, %cst_49 [1] : vector<8x288xf32> to vector<8xf32>
    %173 = vector.shape_cast %172 : vector<8xf32> to vector<8x1xf32>
    %cst_50 = arith.constant 3.906250e-03 : f32
    %174 = vector.broadcast %cst_50 : f32 to vector<8x1xf32>
    %175 = arith.mulf %173, %174 : vector<8x1xf32>
    %176 = vector.broadcast %164 : vector<8x1xf32> to vector<8x288xf32>
    %177 = arith.subf %156, %176 : vector<8x288xf32>
    %cst_51 = arith.constant 9.99999974E-6 : f32
    %178 = vector.broadcast %cst_51 : f32 to vector<8x1xf32>
    %179 = arith.addf %175, %178 : vector<8x1xf32>
    %180 = math.rsqrt %179 : vector<8x1xf32>
    %181 = vector.broadcast %180 : vector<8x1xf32> to vector<8x288xf32>
    %182 = arith.mulf %177, %181 : vector<8x288xf32>
    %183 = vector.extract_strided_slice %20 {offsets = [0, 19], sizes = [8, 288], strides = [1, 1]} : vector<8x384xbf16> to vector<8x288xbf16>
    %184 = arith.extf %183 : vector<8x288xbf16> to vector<8x288xf32>
    %185 = arith.addf %182, %184 : vector<8x288xf32>
    %c0_52 = arith.constant 0 : index
    %c0_53 = arith.constant 0 : index
    %c0_54 = arith.constant 0 : index
    %186 = vector.load %arg6[%c0_52, %c0_53, %c0_54] : memref<1x8x288xf32, #tpu.memory_space<vmem>>, vector<1x8x288xf32>
    %187 = vector.shape_cast %186 : vector<1x8x288xf32> to vector<8x288xf32>
    %188 = vector.shape_cast %185 : vector<8x288xf32> to vector<1x8x288xf32>
    tpu.vector_store %arg6[%c0_52, %c0_53, %c0_54], %188 {strides = array<i32>} : memref<1x8x288xf32, #tpu.memory_space<vmem>>, vector<1x8x288xf32>,
    return
  }
  func.func @transform_0(%arg0: i32) -> (i32, i32, i32) {
    %c0_i32 = arith.constant 0 : i32
    %c0_i32_0 = arith.constant 0 : i32
    %c0_i32_1 = arith.constant 0 : i32
    return %arg0, %c0_i32, %c0_i32_0 : i32, i32, i32
  }
  func.func @transform_1(%arg0: i32) -> (i32, i32, i32) {
    %c0_i32 = arith.constant 0 : i32
    %c0_i32_0 = arith.constant 0 : i32
    %c0_i32_1 = arith.constant 0 : i32
    %c0_i32_2 = arith.constant 0 : i32
    return %c0_i32, %c0_i32_0, %c0_i32_1 : i32, i32, i32
  }
  func.func @transform_2(%arg0: i32) -> (i32, i32) {
    %c0_i32 = arith.constant 0 : i32
    %c0_i32_0 = arith.constant 0 : i32
    %c0_i32_1 = arith.constant 0 : i32
    return %c0_i32, %c0_i32_0 : i32, i32
  }
  func.func @transform_3(%arg0: i32) -> (i32, i32, i32) {
    %c0_i32 = arith.constant 0 : i32
    %c0_i32_0 = arith.constant 0 : i32
    %c0_i32_1 = arith.constant 0 : i32
    %c0_i32_2 = arith.constant 0 : i32
    return %c0_i32, %c0_i32_0, %c0_i32_1 : i32, i32, i32
  }
  func.func @transform_4(%arg0: i32) -> (i32, i32) {
    %c0_i32 = arith.constant 0 : i32
    %c0_i32_0 = arith.constant 0 : i32
    %c0_i32_1 = arith.constant 0 : i32
    return %c0_i32, %c0_i32_0 : i32, i32
  }
  func.func @transform_5(%arg0: i32) -> (i32, i32, i32) {
    %c0_i32 = arith.constant 0 : i32
    %c0_i32_0 = arith.constant 0 : i32
    %c0_i32_1 = arith.constant 0 : i32
    return %arg0, %c0_i32, %c0_i32_0 : i32, i32, i32
  }
}

</mosaic_0001>

<llo_original>
// kernel: res_blocks_forward.2
$region0: #{res_blocks_forward.2}
  #allocation0 [shape = 'u32[]', space=smem, size = 0x4, offset = 0x4, fixed_abs, tag = 'smem constant byte address 0x4 - core index']
  #allocation1 [shape = 'u32[72,128]{1,0:T(1,128)}', space=vmem, size = 0x9000, scoped, tag = 'internal scratch']
  %s0 = inlined_call_operand.vmem [shape: bf16[2,8,384], index: 0, kind: input, shape index: {}]
  %s1 = inlined_call_operand.vmem [shape: bf16[9,8,8], index: 1, kind: input, shape index: {}]
  %s2 = inlined_call_operand.vmem [shape: f32[8,1], index: 2, kind: input, shape index: {}]
  %s3 = inlined_call_operand.vmem [shape: bf16[9,8,8], index: 3, kind: input, shape index: {}]
  %s4 = inlined_call_operand.vmem [shape: f32[8,1], index: 4, kind: input, shape index: {}]
  %s5 = inlined_call_operand.vmem [shape: f32[2,8,288], index: 5, kind: output, shape index: {}]
  %s6 = sld [smem:[#allocation0]]
  $region53: #{res_blocks_forward.2} parent=0
    _
  %s8 = ssub.s32 1, %s6
  %s9 = scalar_select 0, %s8, %s6
  loop: start=0, step=1, limit=4
  $region2: #{res_blocks_forward.2} parent=0 // loop_pre_header
    _
  $region3: #{res_blocks_forward.2} parent=0 // loop_header
    %s11 = sphi 0, %s15
    %p12 = scmp.ge.s32.totalorder %s11, 4
    %s21 = sphi 0, %s23
    %s24 = sphi 0, %s21
    %s25 = sphi 0, %s24
    %s41 = sphi 0, %s25
    %s45 = sphi 0, %s45
    %s47 = sphi 0, %s45
    %s48 = sphi 0, %s47
    %s62 = sphi 0, %s48
    %s66 = sphi 0, %s66
    %s68 = sphi 0, %s66
    %s69 = sphi 0, %s68
    %s83 = sphi 0, %s69
    %s87 = sphi 0, %s87
    %s89 = sphi 0, %s87
    %s90 = sphi 0, %s89
    %s104 = sphi 0, %s90
    %s108 = sphi 0, %s108
    %s110 = sphi 0, %s108
    %s111 = sphi 0, %s110
    %s125 = sphi 0, %s111
    %s131 = sphi 0, %s133
    %s134 = sphi 0, %s131
    %s135 = sphi 0, %s134
    %s151 = sphi 0, %s135
  $region4: #{res_blocks_forward.2} parent=0 // loop_header_branch
    %14 = sbr.rel (%p12) target = $region8
  $region5: #{res_blocks_forward.2} parent=0 // loop_body
    %s16 = ssub.s32 %s11, 1
    %s17 = ssub.s32 %s11, 2
    %s18 = sadd.s32 %s11, 1
    %s19 = ssub.s32 %s11, %s18
    %p20 = scmp.eq.s32.totalorder %s19, 0
    %s22 = sadd.s32 %s21, 1
    %s23 = scalar_select %p20, %s21, %s22
    %p26 = pneg %p20
    %p27 = scmp.eq.s32.totalorder %s11, 1
    %p28 = por %p26, %p27
    %p29 = scmp.ne.s32.totalorder %s21, %s24
    %p30 = scmp.eq.s32.totalorder %s11, 0
    %p31 = por %p29, %p30
    %p32 = scmp.ne.s32.totalorder %s21, %s24
    %p33 = scmp.eq.s32.totalorder %s16, 1
    %p34 = por %p32, %p33
    %p35 = scmp.ne.s32.totalorder %s24, %s25
    %p36 = scmp.eq.s32.totalorder %s16, 0
    %p37 = por %p35, %p36
    %p38 = scmp.ne.s32.totalorder %s24, %s25
    %p39 = scmp.eq.s32.totalorder %s17, 1
    %p40 = por %p38, %p39
    %p42 = scmp.ne.s32.totalorder %s25, %s41
    %p43 = scmp.eq.s32.totalorder %s17, 0
    %p44 = por %p42, %p43
    %s46 = sadd.s32 %s45, 1
    %p49 = scmp.eq.s32.totalorder %s11, 1
    %p50 = scmp.ne.s32.totalorder %s45, %s47
    %p51 = scmp.eq.s32.totalorder %s11, 0
    %p52 = por %p50, %p51
    %p53 = scmp.ne.s32.totalorder %s45, %s47
    %p54 = scmp.eq.s32.totalorder %s16, 1
    %p55 = por %p53, %p54
    %p56 = scmp.ne.s32.totalorder %s47, %s48
    %p57 = scmp.eq.s32.totalorder %s16, 0
    %p58 = por %p56, %p57
    %p59 = scmp.ne.s32.totalorder %s47, %s48
    %p60 = scmp.eq.s32.totalorder %s17, 1
    %p61 = por %p59, %p60
    %p63 = scmp.ne.s32.totalorder %s48, %s62
    %p64 = scmp.eq.s32.totalorder %s17, 0
    %p65 = por %p63, %p64
    %s67 = sadd.s32 %s66, 1
    %p70 = scmp.eq.s32.totalorder %s11, 1
    %p71 = scmp.ne.s32.totalorder %s66, %s68
    %p72 = scmp.eq.s32.totalorder %s11, 0
    %p73 = por %p71, %p72
    %p74 = scmp.ne.s32.totalorder %s66, %s68
    %p75 = scmp.eq.s32.totalorder %s16, 1
    %p76 = por %p74, %p75
    %p77 = scmp.ne.s32.totalorder %s68, %s69
    %p78 = scmp.eq.s32.totalorder %s16, 0
    %p79 = por %p77, %p78
    %p80 = scmp.ne.s32.totalorder %s68, %s69
    %p81 = scmp.eq.s32.totalorder %s17, 1
    %p82 = por %p80, %p81
    %p84 = scmp.ne.s32.totalorder %s69, %s83
    %p85 = scmp.eq.s32.totalorder %s17, 0
    %p86 = por %p84, %p85
    %s88 = sadd.s32 %s87, 1
    %p91 = scmp.eq.s32.totalorder %s11, 1
    %p92 = scmp.ne.s32.totalorder %s87, %s89
    %p93 = scmp.eq.s32.totalorder %s11, 0
    %p94 = por %p92, %p93
    %p95 = scmp.ne.s32.totalorder %s87, %s89
    %p96 = scmp.eq.s32.totalorder %s16, 1
    %p97 = por %p95, %p96
    %p98 = scmp.ne.s32.totalorder %s89, %s90
    %p99 = scmp.eq.s32.totalorder %s16, 0
    %p100 = por %p98, %p99
    %p101 = scmp.ne.s32.totalorder %s89, %s90
    %p102 = scmp.eq.s32.totalorder %s17, 1
    %p103 = por %p101, %p102
    %p105 = scmp.ne.s32.totalorder %s90, %s104
    %p106 = scmp.eq.s32.totalorder %s17, 0
    %p107 = por %p105, %p106
    %s109 = sadd.s32 %s108, 1
    %p112 = scmp.eq.s32.totalorder %s11, 1
    %p113 = scmp.ne.s32.totalorder %s108, %s110
    %p114 = scmp.eq.s32.totalorder %s11, 0
    %p115 = por %p113, %p114
    %p116 = scmp.ne.s32.totalorder %s108, %s110
    %p117 = scmp.eq.s32.totalorder %s16, 1
    %p118 = por %p116, %p117
    %p119 = scmp.ne.s32.totalorder %s110, %s111
    %p120 = scmp.eq.s32.totalorder %s16, 0
    %p121 = por %p119, %p120
    %p122 = scmp.ne.s32.totalorder %s110, %s111
    %p123 = scmp.eq.s32.totalorder %s17, 1
    %p124 = por %p122, %p123
    %p126 = scmp.ne.s32.totalorder %s111, %s125
    %p127 = scmp.eq.s32.totalorder %s17, 0
    %p128 = por %p126, %p127
    %s129 = ssub.s32 %s11, %s18
    %p130 = scmp.eq.s32.totalorder %s129, 0
    %s132 = sadd.s32 %s131, 1
    %s133 = scalar_select %p130, %s131, %s132
    %p136 = pneg %p130
    %p137 = scmp.eq.s32.totalorder %s11, 1
    %p138 = por %p136, %p137
    %p139 = scmp.ne.s32.totalorder %s131, %s134
    %p140 = scmp.eq.s32.totalorder %s11, 0
    %p141 = por %p139, %p140
    %p142 = scmp.ne.s32.totalorder %s131, %s134
    %p143 = scmp.eq.s32.totalorder %s16, 1
    %p144 = por %p142, %p143
    %p145 = scmp.ne.s32.totalorder %s134, %s135
    %p146 = scmp.eq.s32.totalorder %s16, 0
    %p147 = por %p145, %p146
    %p148 = scmp.ne.s32.totalorder %s134, %s135
    %p149 = scmp.eq.s32.totalorder %s17, 1
    %p150 = por %p148, %p149
    %p152 = scmp.ne.s32.totalorder %s135, %s151
    %p153 = scmp.eq.s32.totalorder %s17, 0
    %p154 = por %p152, %p153
    %p155 = scmp.le.s32.totalorder 1, %s11
    %p156 = scmp.lt.s32.totalorder %s11, 3
    %p157 = pnand %p155, %p156
    %p158 = pneg %p157
    // Predicated region
    $region9: #{res_blocks_forward.2} parent=5 // pred_check
      _
    $region10: #{res_blocks_forward.2} parent=5 // pred_check_branch
      %160 = sbr.rel (%p157) target = $region12
    $region11: #{res_blocks_forward.2} parent=5 // pred_region
      %s161 = ssub.s32 %s11, 1
      // Predicated region
      $region13: #{res_blocks_forward.2} parent=11 // pred_check
        %p162 = pneg %p58
      $region14: #{res_blocks_forward.2} parent=11 // pred_check_branch
        %164 = sbr.rel (%p162) target = $region16
      $region15: #{res_blocks_forward.2} parent=11 // pred_region
        _
      $region16: #{res_blocks_forward.2} parent=11 // pred_fallthru
        _
      // Predicated region
      $region17: #{res_blocks_forward.2} parent=11 // pred_check
        %p165 = pneg %p79
      $region18: #{res_blocks_forward.2} parent=11 // pred_check_branch
        %167 = sbr.rel (%p165) target = $region20
      $region19: #{res_blocks_forward.2} parent=11 // pred_region
        _
      $region20: #{res_blocks_forward.2} parent=11 // pred_fallthru
        _
      // Predicated region
      $region21: #{res_blocks_forward.2} parent=11 // pred_check
        %p168 = pneg %p100
      $region22: #{res_blocks_forward.2} parent=11 // pred_check_branch
        %170 = sbr.rel (%p168) target = $region24
      $region23: #{res_blocks_forward.2} parent=11 // pred_region
        _
      $region24: #{res_blocks_forward.2} parent=11 // pred_fallthru
        _
      // Predicated region
      $region25: #{res_blocks_forward.2} parent=11 // pred_check
        %p171 = pneg %p121
      $region26: #{res_blocks_forward.2} parent=11 // pred_check_branch
        %173 = sbr.rel (%p171) target = $region28
      $region27: #{res_blocks_forward.2} parent=11 // pred_region
        _
      $region28: #{res_blocks_forward.2} parent=11 // pred_fallthru
        _
    $region12: #{res_blocks_forward.2} parent=5 // pred_fallthru
      _
    %p174 = scmp.lt.s32.totalorder %s11, 2
    // Predicated region
    $region29: #{res_blocks_forward.2} parent=5 // pred_check
      %p175 = pneg %p174
    $region30: #{res_blocks_forward.2} parent=5 // pred_check_branch
      %177 = sbr.rel (%p175) target = $region32
    $region31: #{res_blocks_forward.2} parent=5 // pred_region
      // Predicated region
      $region33: #{res_blocks_forward.2} parent=31 // pred_check
        %p178 = pneg %p31
      $region34: #{res_blocks_forward.2} parent=31 // pred_check_branch
        %180 = sbr.rel (%p178) target = $region36
      $region35: #{res_blocks_forward.2} parent=31 // pred_region
        %p181 = scmp.lt.s32.totalorder %s11, 1
        %s182 = scalar_select %p181, %s11, 1
        %s183 = smul.addr %s182, 3
        %s184 = smul.addr %s183, 4
        %s185 = scalar_lea.vmem %s0, %s184
      $region36: #{res_blocks_forward.2} parent=31 // pred_fallthru
        _
    $region32: #{res_blocks_forward.2} parent=5 // pred_fallthru
      _
    %p186 = scmp.le.s32.totalorder 1, %s11
    %p187 = scmp.lt.s32.totalorder %s11, 3
    %p188 = pnand %p186, %p187
    %p189 = pneg %p188
    // Predicated region
    $region37: #{res_blocks_forward.2} parent=5 // pred_check
      _
    $region38: #{res_blocks_forward.2} parent=5 // pred_check_branch
      %191 = sbr.rel (%p188) target = $region40
    $region39: #{res_blocks_forward.2} parent=5 // pred_region
      %s192 = ssub.s32 %s11, 1
      %p193 = scmp.lt.s32.totalorder %s16, 1
      %s194 = scalar_select %p193, %s16, 1
      %s195 = smul.addr %s194, 3
      %s196 = smul.addr %s195, 4
      %s197 = scalar_lea.vmem %s0, %s196
      %p198 = pneg %p37
      %p199 = pneg %p34
      %p200 = pneg %p58
      %p201 = pneg %p55
      %p202 = pneg %p79
      %p203 = pneg %p76
      %p204 = pneg %p100
      %p205 = pneg %p97
      %p206 = pneg %p121
      %p207 = pneg %p118
      %p208 = pneg %p147
      %p209 = pneg %p144
      %p210 = scmp.lt.s32.totalorder %s16, 1
      %s211 = scalar_select %p210, %s16, 1
      %s212 = smul.addr %s211, 3
      %s213 = smul.addr %s212, 8
      %s214 = scalar_lea.vmem %s5, %s213
      %p215 = scmp.lt.s32.totalorder %s16, 1
      %s216 = scalar_select %p215, %s16, 1
      %s217 = smul.addr %s216, 3
      %s218 = smul.addr %s217, 4
      %s219 = scalar_lea.vmem %s0, %s218
      %p220 = scmp.lt.s32.totalorder %s16, 1
      %s221 = scalar_select %p220, %s16, 1
      %s222 = smul.addr %s221, 3
      %s223 = smul.addr %s222, 8
      %s224 = scalar_lea.vmem %s5, %s223
      %v226 = vlaneseq
      %v227 = vand.u32 %v226, 127
      %v228 = vadd.s32 %v227, 128
      %v229 = vadd.s32 %v227, 256
      %vm230 = vcmp.lt.s32.totalorder %v227, 0
      %v231 = vsub.s32 0, %v227
      %v232 = vsel %vm230, %v231, %v227
      %v233 = vand.u32 %v232, 65535
      %v234 = vshrl.u32 %v232, 16
      %v236 = vmul.u32 %v233, 14564
      %v237 = vmul.u32 %v233, 58254
      %v238 = vmul.u32 %v234, 14564
      %v239 = vmul.u32 %v234, 58254
      %v240 = vshll.u32 %v237, 16
      %v241 = vshrl.u32 %v237, 16
      %v242 = vshll.u32 %v238, 16
      %v243 = vshrl.u32 %v238, 16
      %vm244 = vc.u32 %v236, %v240
      %v245 = vsel %vm244, 1, 0
      %v246 = vadd.s32 %v236, %v240
      %v247 = vadd.s32 %v239, %v245
      %vm248 = vc.u32 %v246, %v242
      %v249 = vsel %vm248, 1, 0
      %v250 = vadd.s32 %v246, %v242
      %v251 = vadd.s32 %v247, %v249
      %v252 = vadd.s32 %v251, %v241
      %v253 = vadd.s32 %v252, %v243
      %v254 = vshrl.u32 %v253, 4
      %v255 = vmul.u32 %v254, 18
      %v256 = vsub.s32 %v232, %v255
      %v257 = vsub.s32 0, %v256
      %v258 = vsel %vm230, %v257, %v256
      %vm259 = vcmp.lt.s32.totalorder %v228, 0
      %v260 = vsub.s32 0, %v228
      %v261 = vsel %vm259, %v260, %v228
      %v262 = vand.u32 %v261, 65535
      %v263 = vshrl.u32 %v261, 16
      %v265 = vmul.u32 %v262, 14564
      %v266 = vmul.u32 %v262, 58254
      %v267 = vmul.u32 %v263, 14564
      %v268 = vmul.u32 %v263, 58254
      %v269 = vshll.u32 %v266, 16
      %v270 = vshrl.u32 %v266, 16
      %v271 = vshll.u32 %v267, 16
      %v272 = vshrl.u32 %v267, 16
      %vm273 = vc.u32 %v265, %v269
      %v274 = vsel %vm273, 1, 0
      %v275 = vadd.s32 %v265, %v269
      %v276 = vadd.s32 %v268, %v274
      %vm277 = vc.u32 %v275, %v271
      %v278 = vsel %vm277, 1, 0
      %v279 = vadd.s32 %v275, %v271
      %v280 = vadd.s32 %v276, %v278
      %v281 = vadd.s32 %v280, %v270
      %v282 = vadd.s32 %v281, %v272
      %v283 = vshrl.u32 %v282, 4
      %v284 = vmul.u32 %v283, 18
      %v285 = vsub.s32 %v261, %v284
      %v286 = vsub.s32 0, %v285
      %v287 = vsel %vm259, %v286, %v285
      %vm288 = vcmp.lt.s32.totalorder %v229, 0
      %v289 = vsub.s32 0, %v229
      %v290 = vsel %vm288, %v289, %v229
      %v291 = vand.u32 %v290, 65535
      %v292 = vshrl.u32 %v290, 16
      %v294 = vmul.u32 %v291, 14564
      %v295 = vmul.u32 %v291, 58254
      %v296 = vmul.u32 %v292, 14564
      %v297 = vmul.u32 %v292, 58254
      %v298 = vshll.u32 %v295, 16
      %v299 = vshrl.u32 %v295, 16
      %v300 = vshll.u32 %v296, 16
      %v301 = vshrl.u32 %v296, 16
      %vm302 = vc.u32 %v294, %v298
      %v303 = vsel %vm302, 1, 0
      %v304 = vadd.s32 %v294, %v298
      %v305 = vadd.s32 %v297, %v303
      %vm306 = vc.u32 %v304, %v300
      %v307 = vsel %vm306, 1, 0
      %v308 = vadd.s32 %v304, %v300
      %v309 = vadd.s32 %v305, %v307
      %v310 = vadd.s32 %v309, %v299
      %v311 = vadd.s32 %v310, %v301
      %v312 = vshrl.u32 %v311, 4
      %v313 = vmul.u32 %v312, 18
      %v314 = vsub.s32 %v290, %v313
      %v315 = vsub.s32 0, %v314
      %v316 = vsel %vm288, %v315, %v314
      %vm317 = vcmp.ne.s32.totalorder %v258, 0
      %vm318 = vcmp.ne.s32.totalorder %v287, 0
      %vm319 = vcmp.ne.s32.totalorder %v316, 0
      %vm320 = vcmp.lt.s32.totalorder %v258, 0
      %vm321 = vcmp.lt.s32.totalorder %v287, 0
      %vm322 = vcmp.lt.s32.totalorder %v316, 0
      %vm323 = vmand %vm320, %vm317
      %vm324 = vmand %vm321, %vm318
      %vm325 = vmand %vm322, %vm319
      %v326 = vadd.s32 %v258, 18
      %v327 = vadd.s32 %v287, 18
      %v328 = vadd.s32 %v316, 18
      %v329 = vsel %vm323, %v326, %v258
      %v330 = vsel %vm324, %v327, %v287
      %v331 = vsel %vm325, %v328, %v316
      %vm332 = vcmp.lt.s32.totalorder %v329, 16
      %vm333 = vcmp.lt.s32.totalorder %v330, 16
      %vm334 = vcmp.lt.s32.totalorder %v331, 16
      %v335 = vld [vmem:[%s219] sm:$0xff]
      %v336 = vld [vmem:[%s219 + $0x8] sm:$0xf]
      %v337 = vld [vmem:[%s1] sm:$0xf]
      %v338 = vld [vmem:[%s1 + $0x4] sm:$0xf]
      %v339 = vld [vmem:[%s1 + $0x8] sm:$0xf]
      %v340 = vld [vmem:[%s1 + $0xc] sm:$0xf]
      %v341 = vld [vmem:[%s1 + $0x10] sm:$0xf]
      %v342 = vld [vmem:[%s1 + $0x14] sm:$0xf]
      %v343 = vld [vmem:[%s1 + $0x18] sm:$0xf]
      %v344 = vld [vmem:[%s1 + $0x1c] sm:$0xf]
      %v345 = vld [vmem:[%s1 + $0x20] sm:$0xf]
      %v348 = vunpack.c.l.b16 %v335
      %v349 = vunpack.c.h.b16 %v335
      %v350 = vunpack.c.l.b16 %v336
      %v351 = vpack.c.b16 %v348, %v348
      %v352 = vpack.c.b16 %v349, %v349
      %v353 = vpack.c.b16 %v350, %v350
      %354 = vrot.lane.b32.xlu0 %v351, 127
      %v355 = vpop.permute.xlu0 %354
      %356 = vrot.lane.b32.xlu0 %v352, 127
      %v357 = vpop.permute.xlu0 %356
      %358 = vrot.lane.b32.xlu0 %v353, 127
      %v359 = vpop.permute.xlu0 %358
      %vm360 = vcmask 1039360
      %v361 = vsel %vm360, %v355, %v357
      %v362 = vsel %vm360, %v357, %v359
      %vm363 = vcmask 64512
      %v365 = vsel %vm363, %v338, 0
      %vm367 = vcmask 1043456
      %v369 = vsel %vm367, %v361, 0
      %v372 = vsel %vm367, %v362, 0
      %v375 = vsel %vm367, %v359, 0
      %377 = vmatpush.bf16.msra.mxu0 0
      %378 = vmatpush.bf16.msra.mxu0 0
      %379 = vmatpush.bf16.msra.mxu0 0
      %380 = vmatpush.bf16.msra.mxu0 0
      %381 = vmatpush.bf16.msra.mxu0 0
      %382 = vmatpush.bf16.msra.mxu0 0
      %383 = vmatpush.bf16.msra.mxu0 0
      %384 = vmatpush.bf16.msra.mxu0 %v369
      %385 = vmatmul.bf16.gmra.mxu0 %v365
      %v386 = vpop.f32.mrf.mxu0
      %v387 = vadd.f32 0.0, %v386
      %v388 = vpop.f32.mrf.mxu0
      %389 = vdwg.mxu0
      %390 = vmatpush.bf16.msra.mxu0 0
      %391 = vmatpush.bf16.msra.mxu0 0
      %392 = vmatpush.bf16.msra.mxu0 0
      %393 = vmatpush.bf16.msra.mxu0 0
      %394 = vmatpush.bf16.msra.mxu0 0
      %395 = vmatpush.bf16.msra.mxu0 0
      %396 = vmatpush.bf16.msra.mxu0 0
      %397 = vmatpush.bf16.msra.mxu0 %v372
      %398 = vmatmul.bf16.gmra.mxu0 %v365
      %v399 = vpop.f32.mrf.mxu0
      %v400 = vadd.f32 0.0, %v399
      %v401 = vpop.f32.mrf.mxu0
      %402 = vdwg.mxu0
      %403 = vmatpush.bf16.msra.mxu0 0
      %404 = vmatpush.bf16.msra.mxu0 0
      %405 = vmatpush.bf16.msra.mxu0 0
      %406 = vmatpush.bf16.msra.mxu0 0
      %407 = vmatpush.bf16.msra.mxu0 0
      %408 = vmatpush.bf16.msra.mxu0 0
      %409 = vmatpush.bf16.msra.mxu0 0
      %410 = vmatpush.bf16.msra.mxu0 %v375
      %411 = vmatmul.bf16.gmra.mxu0 %v365
      %v412 = vpop.f32.mrf.mxu0
      %v413 = vadd.f32 0.0, %v412
      %v414 = vpop.f32.mrf.mxu0
      %415 = vdwg.mxu0
      %v417 = vsel %vm363, %v337, 0
      %v420 = vsel %vm367, %v351, 0
      %v423 = vsel %vm367, %v352, 0
      %v426 = vsel %vm367, %v353, 0
      %428 = vmatpush.bf16.msra.mxu0 0
      %429 = vmatpush.bf16.msra.mxu0 0
      %430 = vmatpush.bf16.msra.mxu0 0
      %431 = vmatpush.bf16.msra.mxu0 0
      %432 = vmatpush.bf16.msra.mxu0 0
      %433 = vmatpush.bf16.msra.mxu0 0
      %434 = vmatpush.bf16.msra.mxu0 0
      %435 = vmatpush.bf16.msra.mxu0 %v420
      %436 = vmatmul.bf16.gmra.mxu0 %v417
      %v437 = vpop.f32.mrf.mxu0
      %v438 = vadd.f32 %v387, %v437
      %v439 = vpop.f32.mrf.mxu0
      %440 = vdwg.mxu0
      %441 = vmatpush.bf16.msra.mxu0 0
      %442 = vmatpush.bf16.msra.mxu0 0
      %443 = vmatpush.bf16.msra.mxu0 0
      %444 = vmatpush.bf16.msra.mxu0 0
      %445 = vmatpush.bf16.msra.mxu0 0
      %446 = vmatpush.bf16.msra.mxu0 0
      %447 = vmatpush.bf16.msra.mxu0 0
      %448 = vmatpush.bf16.msra.mxu0 %v423
      %449 = vmatmul.bf16.gmra.mxu0 %v417
      %v450 = vpop.f32.mrf.mxu0
      %v451 = vadd.f32 %v400, %v450
      %v452 = vpop.f32.mrf.mxu0
      %453 = vdwg.mxu0
      %454 = vmatpush.bf16.msra.mxu0 0
      %455 = vmatpush.bf16.msra.mxu0 0
      %456 = vmatpush.bf16.msra.mxu0 0
      %457 = vmatpush.bf16.msra.mxu0 0
      %458 = vmatpush.bf16.msra.mxu0 0
      %459 = vmatpush.bf16.msra.mxu0 0
      %460 = vmatpush.bf16.msra.mxu0 0
      %461 = vmatpush.bf16.msra.mxu0 %v426
      %462 = vmatmul.bf16.gmra.mxu0 %v417
      %v463 = vpop.f32.mrf.mxu0
      %v464 = vadd.f32 %v413, %v463
      %v465 = vpop.f32.mrf.mxu0
      %466 = vdwg.mxu0
      %467 = vrot.lane.b32.xlu0 %v351, 126
      %v468 = vpop.permute.xlu0 %467
      %469 = vrot.lane.b32.xlu0 %v352, 126
      %v470 = vpop.permute.xlu0 %469
      %471 = vrot.lane.b32.xlu0 %v353, 126
      %v472 = vpop.permute.xlu0 %471
      %vm473 = vcmask 1031168
      %v474 = vsel %vm473, %v468, %v470
      %v475 = vsel %vm473, %v470, %v472
      %v477 = vsel %vm363, %v339, 0
      %v480 = vsel %vm367, %v474, 0
      %v483 = vsel %vm367, %v475, 0
      %v486 = vsel %vm367, %v472, 0
      %488 = vmatpush.bf16.msra.mxu0 0
      %489 = vmatpush.bf16.msra.mxu0 0
      %490 = vmatpush.bf16.msra.mxu0 0
      %491 = vmatpush.bf16.msra.mxu0 0
      %492 = vmatpush.bf16.msra.mxu0 0
      %493 = vmatpush.bf16.msra.mxu0 0
      %494 = vmatpush.bf16.msra.mxu0 0
      %495 = vmatpush.bf16.msra.mxu0 %v480
      %496 = vmatmul.bf16.gmra.mxu0 %v477
      %v497 = vpop.f32.mrf.mxu0
      %v498 = vadd.f32 0.0, %v497
      %v499 = vpop.f32.mrf.mxu0
      %500 = vdwg.mxu0
      %501 = vmatpush.bf16.msra.mxu0 0
      %502 = vmatpush.bf16.msra.mxu0 0
      %503 = vmatpush.bf16.msra.mxu0 0
      %504 = vmatpush.bf16.msra.mxu0 0
      %505 = vmatpush.bf16.msra.mxu0 0
      %506 = vmatpush.bf16.msra.mxu0 0
      %507 = vmatpush.bf16.msra.mxu0 0
      %508 = vmatpush.bf16.msra.mxu0 %v483
      %509 = vmatmul.bf16.gmra.mxu0 %v477
      %v510 = vpop.f32.mrf.mxu0
      %v511 = vadd.f32 0.0, %v510
      %v512 = vpop.f32.mrf.mxu0
      %513 = vdwg.mxu0
      %514 = vmatpush.bf16.msra.mxu0 0
      %515 = vmatpush.bf16.msra.mxu0 0
      %516 = vmatpush.bf16.msra.mxu0 0
      %517 = vmatpush.bf16.msra.mxu0 0
      %518 = vmatpush.bf16.msra.mxu0 0
      %519 = vmatpush.bf16.msra.mxu0 0
      %520 = vmatpush.bf16.msra.mxu0 0
      %521 = vmatpush.bf16.msra.mxu0 %v486
      %522 = vmatmul.bf16.gmra.mxu0 %v477
      %v523 = vpop.f32.mrf.mxu0
      %v524 = vadd.f32 0.0, %v523
      %v525 = vpop.f32.mrf.mxu0
      %526 = vdwg.mxu0
      %v527 = vadd.f32 %v438, %v498
      %v528 = vadd.f32 %v451, %v511
      %v529 = vadd.f32 %v464, %v524
      %530 = vrot.lane.b32.xlu0 %v351, 110
      %v531 = vpop.permute.xlu0 %530
      %532 = vrot.lane.b32.xlu0 %v352, 110
      %v533 = vpop.permute.xlu0 %532
      %534 = vrot.lane.b32.xlu0 %v353, 110
      %v535 = vpop.permute.xlu0 %534
      %vm536 = vcmask 900096
      %v537 = vsel %vm536, %v531, %v533
      %v538 = vsel %vm536, %v533, %v535
      %v540 = vsel %vm363, %v340, 0
      %v543 = vsel %vm367, %v537, 0
      %v546 = vsel %vm367, %v538, 0
      %v549 = vsel %vm367, %v535, 0
      %551 = vmatpush.bf16.msra.mxu0 0
      %552 = vmatpush.bf16.msra.mxu0 0
      %553 = vmatpush.bf16.msra.mxu0 0
      %554 = vmatpush.bf16.msra.mxu0 0
      %555 = vmatpush.bf16.msra.mxu0 0
      %556 = vmatpush.bf16.msra.mxu0 0
      %557 = vmatpush.bf16.msra.mxu0 0
      %558 = vmatpush.bf16.msra.mxu0 %v543
      %559 = vmatmul.bf16.gmra.mxu0 %v540
      %v560 = vpop.f32.mrf.mxu0
      %v561 = vadd.f32 0.0, %v560
      %v562 = vpop.f32.mrf.mxu0
      %563 = vdwg.mxu0
      %564 = vmatpush.bf16.msra.mxu0 0
      %565 = vmatpush.bf16.msra.mxu0 0
      %566 = vmatpush.bf16.msra.mxu0 0
      %567 = vmatpush.bf16.msra.mxu0 0
      %568 = vmatpush.bf16.msra.mxu0 0
      %569 = vmatpush.bf16.msra.mxu0 0
      %570 = vmatpush.bf16.msra.mxu0 0
      %571 = vmatpush.bf16.msra.mxu0 %v546
      %572 = vmatmul.bf16.gmra.mxu0 %v540
      %v573 = vpop.f32.mrf.mxu0
      %v574 = vadd.f32 0.0, %v573
      %v575 = vpop.f32.mrf.mxu0
      %576 = vdwg.mxu0
      %577 = vmatpush.bf16.msra.mxu0 0
      %578 = vmatpush.bf16.msra.mxu0 0
      %579 = vmatpush.bf16.msra.mxu0 0
      %580 = vmatpush.bf16.msra.mxu0 0
      %581 = vmatpush.bf16.msra.mxu0 0
      %582 = vmatpush.bf16.msra.mxu0 0
      %583 = vmatpush.bf16.msra.mxu0 0
      %584 = vmatpush.bf16.msra.mxu0 %v549
      %585 = vmatmul.bf16.gmra.mxu0 %v540
      %v586 = vpop.f32.mrf.mxu0
      %v587 = vadd.f32 0.0, %v586
      %v588 = vpop.f32.mrf.mxu0
      %589 = vdwg.mxu0
      %v590 = vadd.f32 %v527, %v561
      %v591 = vadd.f32 %v528, %v574
      %v592 = vadd.f32 %v529, %v587
      %593 = vrot.lane.b32.xlu0 %v351, 109
      %v594 = vpop.permute.xlu0 %593
      %595 = vrot.lane.b32.xlu0 %v352, 109
      %v596 = vpop.permute.xlu0 %595
      %597 = vrot.lane.b32.xlu0 %v353, 109
      %v598 = vpop.permute.xlu0 %597
      %vm599 = vcmask 891904
      %v600 = vsel %vm599, %v594, %v596
      %v601 = vsel %vm599, %v596, %v598
      %v603 = vsel %vm363, %v341, 0
      %v606 = vsel %vm367, %v600, 0
      %v609 = vsel %vm367, %v601, 0
      %v612 = vsel %vm367, %v598, 0
      %614 = vmatpush.bf16.msra.mxu0 0
      %615 = vmatpush.bf16.msra.mxu0 0
      %616 = vmatpush.bf16.msra.mxu0 0
      %617 = vmatpush.bf16.msra.mxu0 0
      %618 = vmatpush.bf16.msra.mxu0 0
      %619 = vmatpush.bf16.msra.mxu0 0
      %620 = vmatpush.bf16.msra.mxu0 0
      %621 = vmatpush.bf16.msra.mxu0 %v606
      %622 = vmatmul.bf16.gmra.mxu0 %v603
      %v623 = vpop.f32.mrf.mxu0
      %v624 = vadd.f32 0.0, %v623
      %v625 = vpop.f32.mrf.mxu0
      %626 = vdwg.mxu0
      %627 = vmatpush.bf16.msra.mxu0 0
      %628 = vmatpush.bf16.msra.mxu0 0
      %629 = vmatpush.bf16.msra.mxu0 0
      %630 = vmatpush.bf16.msra.mxu0 0
      %631 = vmatpush.bf16.msra.mxu0 0
      %632 = vmatpush.bf16.msra.mxu0 0
      %633 = vmatpush.bf16.msra.mxu0 0
      %634 = vmatpush.bf16.msra.mxu0 %v609
      %635 = vmatmul.bf16.gmra.mxu0 %v603
      %v636 = vpop.f32.mrf.mxu0
      %v637 = vadd.f32 0.0, %v636
      %v638 = vpop.f32.mrf.mxu0
      %639 = vdwg.mxu0
      %640 = vmatpush.bf16.msra.mxu0 0
      %641 = vmatpush.bf16.msra.mxu0 0
      %642 = vmatpush.bf16.msra.mxu0 0
      %643 = vmatpush.bf16.msra.mxu0 0
      %644 = vmatpush.bf16.msra.mxu0 0
      %645 = vmatpush.bf16.msra.mxu0 0
      %646 = vmatpush.bf16.msra.mxu0 0
      %647 = vmatpush.bf16.msra.mxu0 %v612
      %648 = vmatmul.bf16.gmra.mxu0 %v603
      %v649 = vpop.f32.mrf.mxu0
      %v650 = vadd.f32 0.0, %v649
      %v651 = vpop.f32.mrf.mxu0
      %652 = vdwg.mxu0
      %v653 = vadd.f32 %v590, %v624
      %v654 = vadd.f32 %v591, %v637
      %v655 = vadd.f32 %v592, %v650
      %656 = vrot.lane.b32.xlu0 %v351, 108
      %v657 = vpop.permute.xlu0 %656
      %658 = vrot.lane.b32.xlu0 %v352, 108
      %v659 = vpop.permute.xlu0 %658
      %660 = vrot.lane.b32.xlu0 %v353, 108
      %v661 = vpop.permute.xlu0 %660
      %vm662 = vcmask 883712
      %v663 = vsel %vm662, %v657, %v659
      %v664 = vsel %vm662, %v659, %v661
      %v666 = vsel %vm363, %v342, 0
      %v669 = vsel %vm367, %v663, 0
      %v672 = vsel %vm367, %v664, 0
      %v675 = vsel %vm367, %v661, 0
      %677 = vmatpush.bf16.msra.mxu0 0
      %678 = vmatpush.bf16.msra.mxu0 0
      %679 = vmatpush.bf16.msra.mxu0 0
      %680 = vmatpush.bf16.msra.mxu0 0
      %681 = vmatpush.bf16.msra.mxu0 0
      %682 = vmatpush.bf16.msra.mxu0 0
      %683 = vmatpush.bf16.msra.mxu0 0
      %684 = vmatpush.bf16.msra.mxu0 %v669
      %685 = vmatmul.bf16.gmra.mxu0 %v666
      %v686 = vpop.f32.mrf.mxu0
      %v687 = vadd.f32 0.0, %v686
      %v688 = vpop.f32.mrf.mxu0
      %689 = vdwg.mxu0
      %690 = vmatpush.bf16.msra.mxu0 0
      %691 = vmatpush.bf16.msra.mxu0 0
      %692 = vmatpush.bf16.msra.mxu0 0
      %693 = vmatpush.bf16.msra.mxu0 0
      %694 = vmatpush.bf16.msra.mxu0 0
      %695 = vmatpush.bf16.msra.mxu0 0
      %696 = vmatpush.bf16.msra.mxu0 0
      %697 = vmatpush.bf16.msra.mxu0 %v672
      %698 = vmatmul.bf16.gmra.mxu0 %v666
      %v699 = vpop.f32.mrf.mxu0
      %v700 = vadd.f32 0.0, %v699
      %v701 = vpop.f32.mrf.mxu0
      %702 = vdwg.mxu0
      %703 = vmatpush.bf16.msra.mxu0 0
      %704 = vmatpush.bf16.msra.mxu0 0
      %705 = vmatpush.bf16.msra.mxu0 0
      %706 = vmatpush.bf16.msra.mxu0 0
      %707 = vmatpush.bf16.msra.mxu0 0
      %708 = vmatpush.bf16.msra.mxu0 0
      %709 = vmatpush.bf16.msra.mxu0 0
      %710 = vmatpush.bf16.msra.mxu0 %v675
      %711 = vmatmul.bf16.gmra.mxu0 %v666
      %v712 = vpop.f32.mrf.mxu0
      %v713 = vadd.f32 0.0, %v712
      %v714 = vpop.f32.mrf.mxu0
      %715 = vdwg.mxu0
      %v716 = vadd.f32 %v653, %v687
      %v717 = vadd.f32 %v654, %v700
      %v718 = vadd.f32 %v655, %v713
      %719 = vrot.lane.b32.xlu0 %v351, 92
      %v720 = vpop.permute.xlu0 %719
      %721 = vrot.lane.b32.xlu0 %v352, 92
      %v722 = vpop.permute.xlu0 %721
      %723 = vrot.lane.b32.xlu0 %v353, 92
      %v724 = vpop.permute.xlu0 %723
      %vm725 = vcmask 752640
      %v726 = vsel %vm725, %v720, %v722
      %v727 = vsel %vm725, %v722, %v724
      %v729 = vsel %vm363, %v343, 0
      %v732 = vsel %vm367, %v726, 0
      %v735 = vsel %vm367, %v727, 0
      %v738 = vsel %vm367, %v724, 0
      %740 = vmatpush.bf16.msra.mxu0 0
      %741 = vmatpush.bf16.msra.mxu0 0
      %742 = vmatpush.bf16.msra.mxu0 0
      %743 = vmatpush.bf16.msra.mxu0 0
      %744 = vmatpush.bf16.msra.mxu0 0
      %745 = vmatpush.bf16.msra.mxu0 0
      %746 = vmatpush.bf16.msra.mxu0 0
      %747 = vmatpush.bf16.msra.mxu0 %v732
      %748 = vmatmul.bf16.gmra.mxu0 %v729
      %v749 = vpop.f32.mrf.mxu0
      %v750 = vadd.f32 0.0, %v749
      %v751 = vpop.f32.mrf.mxu0
      %752 = vdwg.mxu0
      %753 = vmatpush.bf16.msra.mxu0 0
      %754 = vmatpush.bf16.msra.mxu0 0
      %755 = vmatpush.bf16.msra.mxu0 0
      %756 = vmatpush.bf16.msra.mxu0 0
      %757 = vmatpush.bf16.msra.mxu0 0
      %758 = vmatpush.bf16.msra.mxu0 0
      %759 = vmatpush.bf16.msra.mxu0 0
      %760 = vmatpush.bf16.msra.mxu0 %v735
      %761 = vmatmul.bf16.gmra.mxu0 %v729
      %v762 = vpop.f32.mrf.mxu0
      %v763 = vadd.f32 0.0, %v762
      %v764 = vpop.f32.mrf.mxu0
      %765 = vdwg.mxu0
      %766 = vmatpush.bf16.msra.mxu0 0
      %767 = vmatpush.bf16.msra.mxu0 0
      %768 = vmatpush.bf16.msra.mxu0 0
      %769 = vmatpush.bf16.msra.mxu0 0
      %770 = vmatpush.bf16.msra.mxu0 0
      %771 = vmatpush.bf16.msra.mxu0 0
      %772 = vmatpush.bf16.msra.mxu0 0
      %773 = vmatpush.bf16.msra.mxu0 %v738
      %774 = vmatmul.bf16.gmra.mxu0 %v729
      %v775 = vpop.f32.mrf.mxu0
      %v776 = vadd.f32 0.0, %v775
      %v777 = vpop.f32.mrf.mxu0
      %778 = vdwg.mxu0
      %v779 = vadd.f32 %v716, %v750
      %v780 = vadd.f32 %v717, %v763
      %v781 = vadd.f32 %v718, %v776
      %782 = vrot.lane.b32.xlu0 %v351, 91
      %v783 = vpop.permute.xlu0 %782
      %784 = vrot.lane.b32.xlu0 %v352, 91
      %v785 = vpop.permute.xlu0 %784
      %786 = vrot.lane.b32.xlu0 %v353, 91
      %v787 = vpop.permute.xlu0 %786
      %vm788 = vcmask 744448
      %v789 = vsel %vm788, %v783, %v785
      %v790 = vsel %vm788, %v785, %v787
      %v792 = vsel %vm363, %v344, 0
      %v795 = vsel %vm367, %v789, 0
      %v798 = vsel %vm367, %v790, 0
      %v801 = vsel %vm367, %v787, 0
      %803 = vmatpush.bf16.msra.mxu0 0
      %804 = vmatpush.bf16.msra.mxu0 0
      %805 = vmatpush.bf16.msra.mxu0 0
      %806 = vmatpush.bf16.msra.mxu0 0
      %807 = vmatpush.bf16.msra.mxu0 0
      %808 = vmatpush.bf16.msra.mxu0 0
      %809 = vmatpush.bf16.msra.mxu0 0
      %810 = vmatpush.bf16.msra.mxu0 %v795
      %811 = vmatmul.bf16.gmra.mxu0 %v792
      %v812 = vpop.f32.mrf.mxu0
      %v813 = vadd.f32 0.0, %v812
      %v814 = vpop.f32.mrf.mxu0
      %815 = vdwg.mxu0
      %816 = vmatpush.bf16.msra.mxu0 0
      %817 = vmatpush.bf16.msra.mxu0 0
      %818 = vmatpush.bf16.msra.mxu0 0
      %819 = vmatpush.bf16.msra.mxu0 0
      %820 = vmatpush.bf16.msra.mxu0 0
      %821 = vmatpush.bf16.msra.mxu0 0
      %822 = vmatpush.bf16.msra.mxu0 0
      %823 = vmatpush.bf16.msra.mxu0 %v798
      %824 = vmatmul.bf16.gmra.mxu0 %v792
      %v825 = vpop.f32.mrf.mxu0
      %v826 = vadd.f32 0.0, %v825
      %v827 = vpop.f32.mrf.mxu0
      %828 = vdwg.mxu0
      %829 = vmatpush.bf16.msra.mxu0 0
      %830 = vmatpush.bf16.msra.mxu0 0
      %831 = vmatpush.bf16.msra.mxu0 0
      %832 = vmatpush.bf16.msra.mxu0 0
      %833 = vmatpush.bf16.msra.mxu0 0
      %834 = vmatpush.bf16.msra.mxu0 0
      %835 = vmatpush.bf16.msra.mxu0 0
      %836 = vmatpush.bf16.msra.mxu0 %v801
      %837 = vmatmul.bf16.gmra.mxu0 %v792
      %v838 = vpop.f32.mrf.mxu0
      %v839 = vadd.f32 0.0, %v838
      %v840 = vpop.f32.mrf.mxu0
      %841 = vdwg.mxu0
      %v842 = vadd.f32 %v779, %v813
      %v843 = vadd.f32 %v780, %v826
      %v844 = vadd.f32 %v781, %v839
      %845 = vrot.lane.b32.xlu0 %v351, 90
      %v846 = vpop.permute.xlu0 %845
      %847 = vrot.lane.b32.xlu0 %v352, 90
      %v848 = vpop.permute.xlu0 %847
      %849 = vrot.lane.b32.xlu0 %v353, 90
      %v850 = vpop.permute.xlu0 %849
      %vm851 = vcmask 736256
      %v852 = vsel %vm851, %v846, %v848
      %v853 = vsel %vm851, %v848, %v850
      %v855 = vsel %vm363, %v345, 0
      %v858 = vsel %vm367, %v852, 0
      %v861 = vsel %vm367, %v853, 0
      %v864 = vsel %vm367, %v850, 0
      %866 = vmatpush.bf16.msra.mxu0 0
      %867 = vmatpush.bf16.msra.mxu0 0
      %868 = vmatpush.bf16.msra.mxu0 0
      %869 = vmatpush.bf16.msra.mxu0 0
      %870 = vmatpush.bf16.msra.mxu0 0
      %871 = vmatpush.bf16.msra.mxu0 0
      %872 = vmatpush.bf16.msra.mxu0 0
      %873 = vmatpush.bf16.msra.mxu0 %v858
      %874 = vmatmul.bf16.gmra.mxu0 %v855
      %v875 = vpop.f32.mrf.mxu0
      %v876 = vadd.f32 0.0, %v875
      %v877 = vpop.f32.mrf.mxu0
      %878 = vdwg.mxu0
      %879 = vmatpush.bf16.msra.mxu0 0
      %880 = vmatpush.bf16.msra.mxu0 0
      %881 = vmatpush.bf16.msra.mxu0 0
      %882 = vmatpush.bf16.msra.mxu0 0
      %883 = vmatpush.bf16.msra.mxu0 0
      %884 = vmatpush.bf16.msra.mxu0 0
      %885 = vmatpush.bf16.msra.mxu0 0
      %886 = vmatpush.bf16.msra.mxu0 %v861
      %887 = vmatmul.bf16.gmra.mxu0 %v855
      %v888 = vpop.f32.mrf.mxu0
      %v889 = vadd.f32 0.0, %v888
      %v890 = vpop.f32.mrf.mxu0
      %891 = vdwg.mxu0
      %892 = vmatpush.bf16.msra.mxu0 0
      %893 = vmatpush.bf16.msra.mxu0 0
      %894 = vmatpush.bf16.msra.mxu0 0
      %895 = vmatpush.bf16.msra.mxu0 0
      %896 = vmatpush.bf16.msra.mxu0 0
      %897 = vmatpush.bf16.msra.mxu0 0
      %898 = vmatpush.bf16.msra.mxu0 0
      %899 = vmatpush.bf16.msra.mxu0 %v864
      %900 = vmatmul.bf16.gmra.mxu0 %v855
      %v901 = vpop.f32.mrf.mxu0
      %v902 = vadd.f32 0.0, %v901
      %v903 = vpop.f32.mrf.mxu0
      %904 = vdwg.mxu0
      %v905 = vadd.f32 %v842, %v876
      %v906 = vadd.f32 %v843, %v889
      %v907 = vadd.f32 %v844, %v902
      %v908 = vld [vmem:[%s2] sm:$0xff]
      %910 = vset.pattern.permute.xlu0 0
      %911 = vperm.xlu0 %910, %v908
      %v912 = vpop.permute.xlu0 %911
      %v914 = vadd.f32 %v905, %v912
      %v915 = vadd.f32 %v906, %v912
      %v916 = vadd.f32 %v907, %v912
      %v917 = vsel %vm332, 1, 0
      %v918 = vsel %vm333, 1, 0
      %v919 = vsel %vm334, 1, 0
      %vm920 = vcmp.eq.s32.totalorder %v917, 1
      %vm921 = vcmp.eq.s32.totalorder %v918, 1
      %vm922 = vcmp.eq.s32.totalorder %v919, 1
      %v923 = vsel %vm920, %v914, 0.0
      %v924 = vsel %vm921, %v915, 0.0
      %v925 = vsel %vm922, %v916, 0.0
      %v926 = vadd.f32 %v923, %v924
      %vm927 = vcmask 261120
      %v928 = vsel %vm927, %v925, 0.0
      %v929 = vadd.f32 %v926, %v928
      %930 = vadd.xlane.f32.xlu0 %v929
      %v931 = vpop.xlane.xlu0 %930
      %v932 = vmul.f32 %v931, 0.00390625
      %v933 = vsub.f32 %v914, %v932
      %v934 = vsub.f32 %v915, %v932
      %v935 = vsub.f32 %v916, %v932
      %v936 = vsel %vm920, %v933, 0.0
      %v937 = vsel %vm921, %v934, 0.0
      %v938 = vsel %vm922, %v935, 0.0
      %v939 = vmul.f32 %v936, %v936
      %v940 = vmul.f32 %v937, %v937
      %v941 = vmul.f32 %v938, %v938
      %v942 = vadd.f32 %v939, %v940
      %v943 = vsel %vm927, %v941, 0.0
      %v944 = vadd.f32 %v942, %v943
      %945 = vadd.xlane.f32.xlu0 %v944
      %v946 = vpop.xlane.xlu0 %945
      %v947 = vmul.f32 %v946, 0.00390625
      %v948 = vadd.f32 %v947, 1e-05
      %v949 = vrsqrt.pop %v948
      %v950 = vmul.f32 %v949, %v948
      %v951 = vmul.f32 %v950, %v949
      %v952 = vmul.f32 0.5, %v951
      %v953 = vsub.f32 1.5, %v952
      %v954 = vmul.f32 %v949, %v953
      %vm955 = vweird.f32 %v948
      %vm956 = vweird.f32 %v949
      %vm957 = vmor %vm955, %vm956
      %v958 = vsel %vm957, %v949, %v954
      %v959 = vmul.f32 %v933, %v958
      %v960 = vmul.f32 %v934, %v958
      %v961 = vmul.f32 %v935, %v958
      %v962 = vmax.f32 %v959, 0.0
      %v963 = vmax.f32 %v960, 0.0
      %v964 = vmax.f32 %v961, 0.0
      %v965 = vsel %vm920, %v962, 0.0
      %v966 = vsel %vm921, %v963, 0.0
      %v967 = vsel %vm922, %v964, 0.0
      %v968 = vpack.c.bf16 %v966, %v965
      %v969 = vpack.c.bf16 %v967, %v967
      %v972 = vunpack.c.l.b16 %v968
      %v973 = vunpack.c.h.b16 %v968
      %v974 = vunpack.c.l.b16 %v969
      %v975 = vpack.c.b16 %v972, %v972
      %v976 = vpack.c.b16 %v973, %v973
      %v977 = vpack.c.b16 %v974, %v974
      %978 = vrot.lane.b32.xlu0 %v975, 19
      %v979 = vpop.permute.xlu0 %978
      %980 = vrot.lane.b32.xlu0 %v976, 19
      %v981 = vpop.permute.xlu0 %980
      %982 = vrot.lane.b32.xlu0 %v977, 19
      %v983 = vpop.permute.xlu0 %982
      %vm984 = vcmask 154624
      %v985 = vsel %vm984, %v979, %v981
      %v986 = vsel %vm984, %v981, %v983
      %vm987 = vcmask 154624
      %v990 = vsel %vm987, 0, %v979
      %vm991 = vcmask 416768
      %v993 = vsel %vm991, %v986, 0
      %v994 = vld [vmem:[%s3] sm:$0xf]
      %v995 = vld [vmem:[%s3 + $0x4] sm:$0xf]
      %v996 = vld [vmem:[%s3 + $0x8] sm:$0xf]
      %v997 = vld [vmem:[%s3 + $0xc] sm:$0xf]
      %v998 = vld [vmem:[%s3 + $0x10] sm:$0xf]
      %v999 = vld [vmem:[%s3 + $0x14] sm:$0xf]
      %v1000 = vld [vmem:[%s3 + $0x18] sm:$0xf]
      %v1001 = vld [vmem:[%s3 + $0x1c] sm:$0xf]
      %v1002 = vld [vmem:[%s3 + $0x20] sm:$0xf]
      %1005 = vrot.lane.b32.xlu0 %v990, 127
      %v1006 = vpop.permute.xlu0 %1005
      %1007 = vrot.lane.b32.xlu0 %v985, 127
      %v1008 = vpop.permute.xlu0 %1007
      %1009 = vrot.lane.b32.xlu0 %v993, 127
      %v1010 = vpop.permute.xlu0 %1009
      %v1011 = vsel %vm360, %v1006, %v1008
      %v1012 = vsel %vm360, %v1008, %v1010
      %v1014 = vsel %vm363, %v995, 0
      %v1017 = vsel %vm367, %v1011, 0
      %v1020 = vsel %vm367, %v1012, 0
      %v1023 = vsel %vm367, %v1010, 0
      %1025 = vmatpush.bf16.msra.mxu0 0
      %1026 = vmatpush.bf16.msra.mxu0 0
      %1027 = vmatpush.bf16.msra.mxu0 0
      %1028 = vmatpush.bf16.msra.mxu0 0
      %1029 = vmatpush.bf16.msra.mxu0 0
      %1030 = vmatpush.bf16.msra.mxu0 0
      %1031 = vmatpush.bf16.msra.mxu0 0
      %1032 = vmatpush.bf16.msra.mxu0 %v1017
      %1033 = vmatmul.bf16.gmra.mxu0 %v1014
      %v1034 = vpop.f32.mrf.mxu0
      %v1035 = vadd.f32 0.0, %v1034
      %v1036 = vpop.f32.mrf.mxu0
      %1037 = vdwg.mxu0
      %1038 = vmatpush.bf16.msra.mxu0 0
      %1039 = vmatpush.bf16.msra.mxu0 0
      %1040 = vmatpush.bf16.msra.mxu0 0
      %1041 = vmatpush.bf16.msra.mxu0 0
      %1042 = vmatpush.bf16.msra.mxu0 0
      %1043 = vmatpush.bf16.msra.mxu0 0
      %1044 = vmatpush.bf16.msra.mxu0 0
      %1045 = vmatpush.bf16.msra.mxu0 %v1020
      %1046 = vmatmul.bf16.gmra.mxu0 %v1014
      %v1047 = vpop.f32.mrf.mxu0
      %v1048 = vadd.f32 0.0, %v1047
      %v1049 = vpop.f32.mrf.mxu0
      %1050 = vdwg.mxu0
      %1051 = vmatpush.bf16.msra.mxu0 0
      %1052 = vmatpush.bf16.msra.mxu0 0
      %1053 = vmatpush.bf16.msra.mxu0 0
      %1054 = vmatpush.bf16.msra.mxu0 0
      %1055 = vmatpush.bf16.msra.mxu0 0
      %1056 = vmatpush.bf16.msra.mxu0 0
      %1057 = vmatpush.bf16.msra.mxu0 0
      %1058 = vmatpush.bf16.msra.mxu0 %v1023
      %1059 = vmatmul.bf16.gmra.mxu0 %v1014
      %v1060 = vpop.f32.mrf.mxu0
      %v1061 = vadd.f32 0.0, %v1060
      %v1062 = vpop.f32.mrf.mxu0
      %1063 = vdwg.mxu0
      %v1065 = vsel %vm363, %v994, 0
      %v1067 = vsel %vm367, %v990, 0
      %v1070 = vsel %vm367, %v985, 0
      %v1072 = vsel %vm367, %v993, 0
      %1074 = vmatpush.bf16.msra.mxu0 0
      %1075 = vmatpush.bf16.msra.mxu0 0
      %1076 = vmatpush.bf16.msra.mxu0 0
      %1077 = vmatpush.bf16.msra.mxu0 0
      %1078 = vmatpush.bf16.msra.mxu0 0
      %1079 = vmatpush.bf16.msra.mxu0 0
      %1080 = vmatpush.bf16.msra.mxu0 0
      %1081 = vmatpush.bf16.msra.mxu0 %v1067
      %1082 = vmatmul.bf16.gmra.mxu0 %v1065
      %v1083 = vpop.f32.mrf.mxu0
      %v1084 = vadd.f32 %v1035, %v1083
      %v1085 = vpop.f32.mrf.mxu0
      %1086 = vdwg.mxu0
      %1087 = vmatpush.bf16.msra.mxu0 0
      %1088 = vmatpush.bf16.msra.mxu0 0
      %1089 = vmatpush.bf16.msra.mxu0 0
      %1090 = vmatpush.bf16.msra.mxu0 0
      %1091 = vmatpush.bf16.msra.mxu0 0
      %1092 = vmatpush.bf16.msra.mxu0 0
      %1093 = vmatpush.bf16.msra.mxu0 0
      %1094 = vmatpush.bf16.msra.mxu0 %v1070
      %1095 = vmatmul.bf16.gmra.mxu0 %v1065
      %v1096 = vpop.f32.mrf.mxu0
      %v1097 = vadd.f32 %v1048, %v1096
      %v1098 = vpop.f32.mrf.mxu0
      %1099 = vdwg.mxu0
      %1100 = vmatpush.bf16.msra.mxu0 0
      %1101 = vmatpush.bf16.msra.mxu0 0
      %1102 = vmatpush.bf16.msra.mxu0 0
      %1103 = vmatpush.bf16.msra.mxu0 0
      %1104 = vmatpush.bf16.msra.mxu0 0
      %1105 = vmatpush.bf16.msra.mxu0 0
      %1106 = vmatpush.bf16.msra.mxu0 0
      %1107 = vmatpush.bf16.msra.mxu0 %v1072
      %1108 = vmatmul.bf16.gmra.mxu0 %v1065
      %v1109 = vpop.f32.mrf.mxu0
      %v1110 = vadd.f32 %v1061, %v1109
      %v1111 = vpop.f32.mrf.mxu0
      %1112 = vdwg.mxu0
      %1113 = vrot.lane.b32.xlu0 %v990, 126
      %v1114 = vpop.permute.xlu0 %1113
      %1115 = vrot.lane.b32.xlu0 %v985, 126
      %v1116 = vpop.permute.xlu0 %1115
      %1117 = vrot.lane.b32.xlu0 %v993, 126
      %v1118 = vpop.permute.xlu0 %1117
      %v1119 = vsel %vm473, %v1114, %v1116
      %v1120 = vsel %vm473, %v1116, %v1118
      %v1122 = vsel %vm363, %v996, 0
      %v1125 = vsel %vm367, %v1119, 0
      %v1128 = vsel %vm367, %v1120, 0
      %v1131 = vsel %vm367, %v1118, 0
      %1133 = vmatpush.bf16.msra.mxu0 0
      %1134 = vmatpush.bf16.msra.mxu0 0
      %1135 = vmatpush.bf16.msra.mxu0 0
      %1136 = vmatpush.bf16.msra.mxu0 0
      %1137 = vmatpush.bf16.msra.mxu0 0
      %1138 = vmatpush.bf16.msra.mxu0 0
      %1139 = vmatpush.bf16.msra.mxu0 0
      %1140 = vmatpush.bf16.msra.mxu0 %v1125
      %1141 = vmatmul.bf16.gmra.mxu0 %v1122
      %v1142 = vpop.f32.mrf.mxu0
      %v1143 = vadd.f32 0.0, %v1142
      %v1144 = vpop.f32.mrf.mxu0
      %1145 = vdwg.mxu0
      %1146 = vmatpush.bf16.msra.mxu0 0
      %1147 = vmatpush.bf16.msra.mxu0 0
      %1148 = vmatpush.bf16.msra.mxu0 0
      %1149 = vmatpush.bf16.msra.mxu0 0
      %1150 = vmatpush.bf16.msra.mxu0 0
      %1151 = vmatpush.bf16.msra.mxu0 0
      %1152 = vmatpush.bf16.msra.mxu0 0
      %1153 = vmatpush.bf16.msra.mxu0 %v1128
      %1154 = vmatmul.bf16.gmra.mxu0 %v1122
      %v1155 = vpop.f32.mrf.mxu0
      %v1156 = vadd.f32 0.0, %v1155
      %v1157 = vpop.f32.mrf.mxu0
      %1158 = vdwg.mxu0
      %1159 = vmatpush.bf16.msra.mxu0 0
      %1160 = vmatpush.bf16.msra.mxu0 0
      %1161 = vmatpush.bf16.msra.mxu0 0
      %1162 = vmatpush.bf16.msra.mxu0 0
      %1163 = vmatpush.bf16.msra.mxu0 0
      %1164 = vmatpush.bf16.msra.mxu0 0
      %1165 = vmatpush.bf16.msra.mxu0 0
      %1166 = vmatpush.bf16.msra.mxu0 %v1131
      %1167 = vmatmul.bf16.gmra.mxu0 %v1122
      %v1168 = vpop.f32.mrf.mxu0
      %v1169 = vadd.f32 0.0, %v1168
      %v1170 = vpop.f32.mrf.mxu0
      %1171 = vdwg.mxu0
      %v1172 = vadd.f32 %v1084, %v1143
      %v1173 = vadd.f32 %v1097, %v1156
      %v1174 = vadd.f32 %v1110, %v1169
      %1175 = vrot.lane.b32.xlu0 %v990, 110
      %v1176 = vpop.permute.xlu0 %1175
      %1177 = vrot.lane.b32.xlu0 %v985, 110
      %v1178 = vpop.permute.xlu0 %1177
      %1179 = vrot.lane.b32.xlu0 %v993, 110
      %v1180 = vpop.permute.xlu0 %1179
      %v1181 = vsel %vm536, %v1176, %v1178
      %v1182 = vsel %vm536, %v1178, %v1180
      %v1184 = vsel %vm363, %v997, 0
      %v1187 = vsel %vm367, %v1181, 0
      %v1190 = vsel %vm367, %v1182, 0
      %v1193 = vsel %vm367, %v1180, 0
      %1195 = vmatpush.bf16.msra.mxu0 0
      %1196 = vmatpush.bf16.msra.mxu0 0
      %1197 = vmatpush.bf16.msra.mxu0 0
      %1198 = vmatpush.bf16.msra.mxu0 0
      %1199 = vmatpush.bf16.msra.mxu0 0
      %1200 = vmatpush.bf16.msra.mxu0 0
      %1201 = vmatpush.bf16.msra.mxu0 0
      %1202 = vmatpush.bf16.msra.mxu0 %v1187
      %1203 = vmatmul.bf16.gmra.mxu0 %v1184
      %v1204 = vpop.f32.mrf.mxu0
      %v1205 = vadd.f32 0.0, %v1204
      %v1206 = vpop.f32.mrf.mxu0
      %1207 = vdwg.mxu0
      %1208 = vmatpush.bf16.msra.mxu0 0
      %1209 = vmatpush.bf16.msra.mxu0 0
      %1210 = vmatpush.bf16.msra.mxu0 0
      %1211 = vmatpush.bf16.msra.mxu0 0
      %1212 = vmatpush.bf16.msra.mxu0 0
      %1213 = vmatpush.bf16.msra.mxu0 0
      %1214 = vmatpush.bf16.msra.mxu0 0
      %1215 = vmatpush.bf16.msra.mxu0 %v1190
      %1216 = vmatmul.bf16.gmra.mxu0 %v1184
      %v1217 = vpop.f32.mrf.mxu0
      %v1218 = vadd.f32 0.0, %v1217
      %v1219 = vpop.f32.mrf.mxu0
      %1220 = vdwg.mxu0
      %1221 = vmatpush.bf16.msra.mxu0 0
      %1222 = vmatpush.bf16.msra.mxu0 0
      %1223 = vmatpush.bf16.msra.mxu0 0
      %1224 = vmatpush.bf16.msra.mxu0 0
      %1225 = vmatpush.bf16.msra.mxu0 0
      %1226 = vmatpush.bf16.msra.mxu0 0
      %1227 = vmatpush.bf16.msra.mxu0 0
      %1228 = vmatpush.bf16.msra.mxu0 %v1193
      %1229 = vmatmul.bf16.gmra.mxu0 %v1184
      %v1230 = vpop.f32.mrf.mxu0
      %v1231 = vadd.f32 0.0, %v1230
      %v1232 = vpop.f32.mrf.mxu0
      %1233 = vdwg.mxu0
      %v1234 = vadd.f32 %v1172, %v1205
      %v1235 = vadd.f32 %v1173, %v1218
      %v1236 = vadd.f32 %v1174, %v1231
      %1237 = vrot.lane.b32.xlu0 %v990, 109
      %v1238 = vpop.permute.xlu0 %1237
      %1239 = vrot.lane.b32.xlu0 %v985, 109
      %v1240 = vpop.permute.xlu0 %1239
      %1241 = vrot.lane.b32.xlu0 %v993, 109
      %v1242 = vpop.permute.xlu0 %1241
      %v1243 = vsel %vm599, %v1238, %v1240
      %v1244 = vsel %vm599, %v1240, %v1242
      %v1246 = vsel %vm363, %v998, 0
      %v1249 = vsel %vm367, %v1243, 0
      %v1252 = vsel %vm367, %v1244, 0
      %v1255 = vsel %vm367, %v1242, 0
      %1257 = vmatpush.bf16.msra.mxu0 0
      %1258 = vmatpush.bf16.msra.mxu0 0
      %1259 = vmatpush.bf16.msra.mxu0 0
      %1260 = vmatpush.bf16.msra.mxu0 0
      %1261 = vmatpush.bf16.msra.mxu0 0
      %1262 = vmatpush.bf16.msra.mxu0 0
      %1263 = vmatpush.bf16.msra.mxu0 0
      %1264 = vmatpush.bf16.msra.mxu0 %v1249
      %1265 = vmatmul.bf16.gmra.mxu0 %v1246
      %v1266 = vpop.f32.mrf.mxu0
      %v1267 = vadd.f32 0.0, %v1266
      %v1268 = vpop.f32.mrf.mxu0
      %1269 = vdwg.mxu0
      %1270 = vmatpush.bf16.msra.mxu0 0
      %1271 = vmatpush.bf16.msra.mxu0 0
      %1272 = vmatpush.bf16.msra.mxu0 0
      %1273 = vmatpush.bf16.msra.mxu0 0
      %1274 = vmatpush.bf16.msra.mxu0 0
      %1275 = vmatpush.bf16.msra.mxu0 0
      %1276 = vmatpush.bf16.msra.mxu0 0
      %1277 = vmatpush.bf16.msra.mxu0 %v1252
      %1278 = vmatmul.bf16.gmra.mxu0 %v1246
      %v1279 = vpop.f32.mrf.mxu0
      %v1280 = vadd.f32 0.0, %v1279
      %v1281 = vpop.f32.mrf.mxu0
      %1282 = vdwg.mxu0
      %1283 = vmatpush.bf16.msra.mxu0 0
      %1284 = vmatpush.bf16.msra.mxu0 0
      %1285 = vmatpush.bf16.msra.mxu0 0
      %1286 = vmatpush.bf16.msra.mxu0 0
      %1287 = vmatpush.bf16.msra.mxu0 0
      %1288 = vmatpush.bf16.msra.mxu0 0
      %1289 = vmatpush.bf16.msra.mxu0 0
      %1290 = vmatpush.bf16.msra.mxu0 %v1255
      %1291 = vmatmul.bf16.gmra.mxu0 %v1246
      %v1292 = vpop.f32.mrf.mxu0
      %v1293 = vadd.f32 0.0, %v1292
      %v1294 = vpop.f32.mrf.mxu0
      %1295 = vdwg.mxu0
      %v1296 = vadd.f32 %v1234, %v1267
      %v1297 = vadd.f32 %v1235, %v1280
      %v1298 = vadd.f32 %v1236, %v1293
      %1299 = vrot.lane.b32.xlu0 %v990, 108
      %v1300 = vpop.permute.xlu0 %1299
      %1301 = vrot.lane.b32.xlu0 %v985, 108
      %v1302 = vpop.permute.xlu0 %1301
      %1303 = vrot.lane.b32.xlu0 %v993, 108
      %v1304 = vpop.permute.xlu0 %1303
      %v1305 = vsel %vm662, %v1300, %v1302
      %v1306 = vsel %vm662, %v1302, %v1304
      %v1308 = vsel %vm363, %v999, 0
      %v1311 = vsel %vm367, %v1305, 0
      %v1314 = vsel %vm367, %v1306, 0
      %v1317 = vsel %vm367, %v1304, 0
      %1319 = vmatpush.bf16.msra.mxu0 0
      %1320 = vmatpush.bf16.msra.mxu0 0
      %1321 = vmatpush.bf16.msra.mxu0 0
      %1322 = vmatpush.bf16.msra.mxu0 0
      %1323 = vmatpush.bf16.msra.mxu0 0
      %1324 = vmatpush.bf16.msra.mxu0 0
      %1325 = vmatpush.bf16.msra.mxu0 0
      %1326 = vmatpush.bf16.msra.mxu0 %v1311
      %1327 = vmatmul.bf16.gmra.mxu0 %v1308
      %v1328 = vpop.f32.mrf.mxu0
      %v1329 = vadd.f32 0.0, %v1328
      %v1330 = vpop.f32.mrf.mxu0
      %1331 = vdwg.mxu0
      %1332 = vmatpush.bf16.msra.mxu0 0
      %1333 = vmatpush.bf16.msra.mxu0 0
      %1334 = vmatpush.bf16.msra.mxu0 0
      %1335 = vmatpush.bf16.msra.mxu0 0
      %1336 = vmatpush.bf16.msra.mxu0 0
      %1337 = vmatpush.bf16.msra.mxu0 0
      %1338 = vmatpush.bf16.msra.mxu0 0
      %1339 = vmatpush.bf16.msra.mxu0 %v1314
      %1340 = vmatmul.bf16.gmra.mxu0 %v1308
      %v1341 = vpop.f32.mrf.mxu0
      %v1342 = vadd.f32 0.0, %v1341
      %v1343 = vpop.f32.mrf.mxu0
      %1344 = vdwg.mxu0
      %1345 = vmatpush.bf16.msra.mxu0 0
      %1346 = vmatpush.bf16.msra.mxu0 0
      %1347 = vmatpush.bf16.msra.mxu0 0
      %1348 = vmatpush.bf16.msra.mxu0 0
      %1349 = vmatpush.bf16.msra.mxu0 0
      %1350 = vmatpush.bf16.msra.mxu0 0
      %1351 = vmatpush.bf16.msra.mxu0 0
      %1352 = vmatpush.bf16.msra.mxu0 %v1317
      %1353 = vmatmul.bf16.gmra.mxu0 %v1308
      %v1354 = vpop.f32.mrf.mxu0
      %v1355 = vadd.f32 0.0, %v1354
      %v1356 = vpop.f32.mrf.mxu0
      %1357 = vdwg.mxu0
      %v1358 = vadd.f32 %v1296, %v1329
      %v1359 = vadd.f32 %v1297, %v1342
      %v1360 = vadd.f32 %v1298, %v1355
      %1361 = vrot.lane.b32.xlu0 %v990, 92
      %v1362 = vpop.permute.xlu0 %1361
      %1363 = vrot.lane.b32.xlu0 %v985, 92
      %v1364 = vpop.permute.xlu0 %1363
      %1365 = vrot.lane.b32.xlu0 %v993, 92
      %v1366 = vpop.permute.xlu0 %1365
      %v1367 = vsel %vm725, %v1362, %v1364
      %v1368 = vsel %vm725, %v1364, %v1366
      %v1370 = vsel %vm363, %v1000, 0
      %v1373 = vsel %vm367, %v1367, 0
      %v1376 = vsel %vm367, %v1368, 0
      %v1379 = vsel %vm367, %v1366, 0
      %1381 = vmatpush.bf16.msra.mxu0 0
      %1382 = vmatpush.bf16.msra.mxu0 0
      %1383 = vmatpush.bf16.msra.mxu0 0
      %1384 = vmatpush.bf16.msra.mxu0 0
      %1385 = vmatpush.bf16.msra.mxu0 0
      %1386 = vmatpush.bf16.msra.mxu0 0
      %1387 = vmatpush.bf16.msra.mxu0 0
      %1388 = vmatpush.bf16.msra.mxu0 %v1373
      %1389 = vmatmul.bf16.gmra.mxu0 %v1370
      %v1390 = vpop.f32.mrf.mxu0
      %v1391 = vadd.f32 0.0, %v1390
      %v1392 = vpop.f32.mrf.mxu0
      %1393 = vdwg.mxu0
      %1394 = vmatpush.bf16.msra.mxu0 0
      %1395 = vmatpush.bf16.msra.mxu0 0
      %1396 = vmatpush.bf16.msra.mxu0 0
      %1397 = vmatpush.bf16.msra.mxu0 0
      %1398 = vmatpush.bf16.msra.mxu0 0
      %1399 = vmatpush.bf16.msra.mxu0 0
      %1400 = vmatpush.bf16.msra.mxu0 0
      %1401 = vmatpush.bf16.msra.mxu0 %v1376
      %1402 = vmatmul.bf16.gmra.mxu0 %v1370
      %v1403 = vpop.f32.mrf.mxu0
      %v1404 = vadd.f32 0.0, %v1403
      %v1405 = vpop.f32.mrf.mxu0
      %1406 = vdwg.mxu0
      %1407 = vmatpush.bf16.msra.mxu0 0
      %1408 = vmatpush.bf16.msra.mxu0 0
      %1409 = vmatpush.bf16.msra.mxu0 0
      %1410 = vmatpush.bf16.msra.mxu0 0
      %1411 = vmatpush.bf16.msra.mxu0 0
      %1412 = vmatpush.bf16.msra.mxu0 0
      %1413 = vmatpush.bf16.msra.mxu0 0
      %1414 = vmatpush.bf16.msra.mxu0 %v1379
      %1415 = vmatmul.bf16.gmra.mxu0 %v1370
      %v1416 = vpop.f32.mrf.mxu0
      %v1417 = vadd.f32 0.0, %v1416
      %v1418 = vpop.f32.mrf.mxu0
      %1419 = vdwg.mxu0
      %v1420 = vadd.f32 %v1358, %v1391
      %v1421 = vadd.f32 %v1359, %v1404
      %v1422 = vadd.f32 %v1360, %v1417
      %1423 = vrot.lane.b32.xlu0 %v990, 91
      %v1424 = vpop.permute.xlu0 %1423
      %1425 = vrot.lane.b32.xlu0 %v985, 91
      %v1426 = vpop.permute.xlu0 %1425
      %1427 = vrot.lane.b32.xlu0 %v993, 91
      %v1428 = vpop.permute.xlu0 %1427
      %v1429 = vsel %vm788, %v1424, %v1426
      %v1430 = vsel %vm788, %v1426, %v1428
      %v1432 = vsel %vm363, %v1001, 0
      %v1435 = vsel %vm367, %v1429, 0
      %v1438 = vsel %vm367, %v1430, 0
      %v1441 = vsel %vm367, %v1428, 0
      %1443 = vmatpush.bf16.msra.mxu0 0
      %1444 = vmatpush.bf16.msra.mxu0 0
      %1445 = vmatpush.bf16.msra.mxu0 0
      %1446 = vmatpush.bf16.msra.mxu0 0
      %1447 = vmatpush.bf16.msra.mxu0 0
      %1448 = vmatpush.bf16.msra.mxu0 0
      %1449 = vmatpush.bf16.msra.mxu0 0
      %1450 = vmatpush.bf16.msra.mxu0 %v1435
      %1451 = vmatmul.bf16.gmra.mxu0 %v1432
      %v1452 = vpop.f32.mrf.mxu0
      %v1453 = vadd.f32 0.0, %v1452
      %v1454 = vpop.f32.mrf.mxu0
      %1455 = vdwg.mxu0
      %1456 = vmatpush.bf16.msra.mxu0 0
      %1457 = vmatpush.bf16.msra.mxu0 0
      %1458 = vmatpush.bf16.msra.mxu0 0
      %1459 = vmatpush.bf16.msra.mxu0 0
      %1460 = vmatpush.bf16.msra.mxu0 0
      %1461 = vmatpush.bf16.msra.mxu0 0
      %1462 = vmatpush.bf16.msra.mxu0 0
      %1463 = vmatpush.bf16.msra.mxu0 %v1438
      %1464 = vmatmul.bf16.gmra.mxu0 %v1432
      %v1465 = vpop.f32.mrf.mxu0
      %v1466 = vadd.f32 0.0, %v1465
      %v1467 = vpop.f32.mrf.mxu0
      %1468 = vdwg.mxu0
      %1469 = vmatpush.bf16.msra.mxu0 0
      %1470 = vmatpush.bf16.msra.mxu0 0
      %1471 = vmatpush.bf16.msra.mxu0 0
      %1472 = vmatpush.bf16.msra.mxu0 0
      %1473 = vmatpush.bf16.msra.mxu0 0
      %1474 = vmatpush.bf16.msra.mxu0 0
      %1475 = vmatpush.bf16.msra.mxu0 0
      %1476 = vmatpush.bf16.msra.mxu0 %v1441
      %1477 = vmatmul.bf16.gmra.mxu0 %v1432
      %v1478 = vpop.f32.mrf.mxu0
      %v1479 = vadd.f32 0.0, %v1478
      %v1480 = vpop.f32.mrf.mxu0
      %1481 = vdwg.mxu0
      %v1482 = vadd.f32 %v1420, %v1453
      %v1483 = vadd.f32 %v1421, %v1466
      %v1484 = vadd.f32 %v1422, %v1479
      %1485 = vrot.lane.b32.xlu0 %v990, 90
      %v1486 = vpop.permute.xlu0 %1485
      %1487 = vrot.lane.b32.xlu0 %v985, 90
      %v1488 = vpop.permute.xlu0 %1487
      %1489 = vrot.lane.b32.xlu0 %v993, 90
      %v1490 = vpop.permute.xlu0 %1489
      %v1491 = vsel %vm851, %v1486, %v1488
      %v1492 = vsel %vm851, %v1488, %v1490
      %v1494 = vsel %vm363, %v1002, 0
      %v1497 = vsel %vm367, %v1491, 0
      %v1500 = vsel %vm367, %v1492, 0
      %v1503 = vsel %vm367, %v1490, 0
      %1505 = vmatpush.bf16.msra.mxu0 0
      %1506 = vmatpush.bf16.msra.mxu0 0
      %1507 = vmatpush.bf16.msra.mxu0 0
      %1508 = vmatpush.bf16.msra.mxu0 0
      %1509 = vmatpush.bf16.msra.mxu0 0
      %1510 = vmatpush.bf16.msra.mxu0 0
      %1511 = vmatpush.bf16.msra.mxu0 0
      %1512 = vmatpush.bf16.msra.mxu0 %v1497
      %1513 = vmatmul.bf16.gmra.mxu0 %v1494
      %v1514 = vpop.f32.mrf.mxu0
      %v1515 = vadd.f32 0.0, %v1514
      %v1516 = vpop.f32.mrf.mxu0
      %1517 = vdwg.mxu0
      %1518 = vmatpush.bf16.msra.mxu0 0
      %1519 = vmatpush.bf16.msra.mxu0 0
      %1520 = vmatpush.bf16.msra.mxu0 0
      %1521 = vmatpush.bf16.msra.mxu0 0
      %1522 = vmatpush.bf16.msra.mxu0 0
      %1523 = vmatpush.bf16.msra.mxu0 0
      %1524 = vmatpush.bf16.msra.mxu0 0
      %1525 = vmatpush.bf16.msra.mxu0 %v1500
      %1526 = vmatmul.bf16.gmra.mxu0 %v1494
      %v1527 = vpop.f32.mrf.mxu0
      %v1528 = vadd.f32 0.0, %v1527
      %v1529 = vpop.f32.mrf.mxu0
      %1530 = vdwg.mxu0
      %1531 = vmatpush.bf16.msra.mxu0 0
      %1532 = vmatpush.bf16.msra.mxu0 0
      %1533 = vmatpush.bf16.msra.mxu0 0
      %1534 = vmatpush.bf16.msra.mxu0 0
      %1535 = vmatpush.bf16.msra.mxu0 0
      %1536 = vmatpush.bf16.msra.mxu0 0
      %1537 = vmatpush.bf16.msra.mxu0 0
      %1538 = vmatpush.bf16.msra.mxu0 %v1503
      %1539 = vmatmul.bf16.gmra.mxu0 %v1494
      %v1540 = vpop.f32.mrf.mxu0
      %v1541 = vadd.f32 0.0, %v1540
      %v1542 = vpop.f32.mrf.mxu0
      %1543 = vdwg.mxu0
      %v1544 = vadd.f32 %v1482, %v1515
      %v1545 = vadd.f32 %v1483, %v1528
      %v1546 = vadd.f32 %v1484, %v1541
      %v1547 = vld [vmem:[%s4] sm:$0xff]
      %1549 = vset.pattern.permute.xlu0 0
      %1550 = vperm.xlu0 %1549, %v1547
      %v1551 = vpop.permute.xlu0 %1550
      %v1553 = vadd.f32 %v1544, %v1551
      %v1554 = vadd.f32 %v1545, %v1551
      %v1555 = vadd.f32 %v1546, %v1551
      %v1556 = vsel %vm920, %v1553, 0.0
      %v1557 = vsel %vm921, %v1554, 0.0
      %v1558 = vsel %vm922, %v1555, 0.0
      %v1559 = vadd.f32 %v1556, %v1557
      %v1560 = vsel %vm927, %v1558, 0.0
      %v1561 = vadd.f32 %v1559, %v1560
      %1562 = vadd.xlane.f32.xlu0 %v1561
      %v1563 = vpop.xlane.xlu0 %1562
      %v1564 = vmul.f32 %v1563, 0.00390625
      %v1565 = vsub.f32 %v1553, %v1564
      %v1566 = vsub.f32 %v1554, %v1564
      %v1567 = vsub.f32 %v1555, %v1564
      %v1568 = vsel %vm920, %v1565, 0.0
      %v1569 = vsel %vm921, %v1566, 0.0
      %v1570 = vsel %vm922, %v1567, 0.0
      %v1571 = vmul.f32 %v1568, %v1568
      %v1572 = vmul.f32 %v1569, %v1569
      %v1573 = vmul.f32 %v1570, %v1570
      %v1574 = vadd.f32 %v1571, %v1572
      %v1575 = vsel %vm927, %v1573, 0.0
      %v1576 = vadd.f32 %v1574, %v1575
      %1577 = vadd.xlane.f32.xlu0 %v1576
      %v1578 = vpop.xlane.xlu0 %1577
      %v1579 = vmul.f32 %v1578, 0.00390625
      %v1580 = vadd.f32 %v1579, 1e-05
      %v1581 = vrsqrt.pop %v1580
      %v1582 = vmul.f32 %v1581, %v1580
      %v1583 = vmul.f32 %v1582, %v1581
      %v1584 = vmul.f32 0.5, %v1583
      %v1585 = vsub.f32 1.5, %v1584
      %v1586 = vmul.f32 %v1581, %v1585
      %vm1587 = vweird.f32 %v1580
      %vm1588 = vweird.f32 %v1581
      %vm1589 = vmor %vm1587, %vm1588
      %v1590 = vsel %vm1589, %v1581, %v1586
      %v1591 = vmul.f32 %v1565, %v1590
      %v1592 = vmul.f32 %v1566, %v1590
      %v1593 = vmul.f32 %v1567, %v1590
      %v1594 = vunpack.c.l.bf16 %v335
      %v1595 = vunpack.c.h.bf16 %v335
      %v1596 = vunpack.c.l.bf16 %v336
      %1600 = vrot.lane.b32.xlu0 %v1594, 109
      %v1601 = vpop.permute.xlu0 %1600
      %1602 = vrot.lane.b32.xlu0 %v1595, 109
      %v1603 = vpop.permute.xlu0 %1602
      %1604 = vrot.lane.b32.xlu0 %v1596, 109
      %v1605 = vpop.permute.xlu0 %1604
      %vm1606 = vcmask 891904
      %v1607 = vsel %vm1606, %v1601, %v1603
      %v1608 = vsel %vm1606, %v1603, %v1605
      %v1612 = vadd.f32 %v1591, %v1607
      %v1613 = vadd.f32 %v1592, %v1608
      %v1614 = vadd.f32 %v1593, %v1605
      %1615 = vst [vmem:[%s224] sm:$0xff] %v1612
      %1616 = vst [vmem:[%s224 + $0x8] sm:$0xff] %v1613
      %1617 = vst.msk [vmem:[%s224 + $0x10] sm:$0xff] %vm927, %v1614
      %p1618 = scmp.lt.s32.totalorder %s16, 1
      %s1619 = scalar_select %p1618, %s16, 1
      %s1620 = smul.addr %s1619, 3
      %s1621 = smul.addr %s1620, 8
      %s1622 = scalar_lea.vmem %s5, %s1621
      // Predicated region
      $region41: #{res_blocks_forward.2} parent=39 // pred_check
        %p1623 = pneg %p144
      $region42: #{res_blocks_forward.2} parent=39 // pred_check_branch
        %1625 = sbr.rel (%p1623) target = $region44
      $region43: #{res_blocks_forward.2} parent=39 // pred_region
        _
      $region44: #{res_blocks_forward.2} parent=39 // pred_fallthru
        _
    $region40: #{res_blocks_forward.2} parent=5 // pred_fallthru
      _
    %p1626 = scmp.le.s32.totalorder 2, %s11
    // Predicated region
    $region45: #{res_blocks_forward.2} parent=5 // pred_check
      %p1627 = pneg %p1626
    $region46: #{res_blocks_forward.2} parent=5 // pred_check_branch
      %1629 = sbr.rel (%p1627) target = $region48
    $region47: #{res_blocks_forward.2} parent=5 // pred_region
      %s1630 = ssub.s32 %s11, 2
      // Predicated region
      $region49: #{res_blocks_forward.2} parent=47 // pred_check
        %p1631 = pneg %p150
      $region50: #{res_blocks_forward.2} parent=47 // pred_check_branch
        %1633 = sbr.rel (%p1631) target = $region52
      $region51: #{res_blocks_forward.2} parent=47 // pred_region
        %p1634 = scmp.lt.s32.totalorder %s17, 1
        %s1635 = scalar_select %p1634, %s17, 1
        %s1636 = smul.addr %s1635, 3
        %s1637 = smul.addr %s1636, 8
        %s1638 = scalar_lea.vmem %s5, %s1637
      $region52: #{res_blocks_forward.2} parent=47 // pred_fallthru
        _
    $region48: #{res_blocks_forward.2} parent=5 // pred_fallthru
      _
  $region6: #{res_blocks_forward.2} parent=0 // loop_footer
    %s15 = sadd.s32 1, %s11
  $region7: #{res_blocks_forward.2} parent=0 // loop_footer_branch
    %10 = sbr.rel target = $region3
  $region8: #{res_blocks_forward.2} parent=0 // loop_exit
    _

</llo_original>
